<compile_context>
chip_gen: v7x
topology: tpu7x:2x2x1
jax: 0.10.0
libtpu: 0.0.40
codegen_flags: <defaults>
</compile_context>

<pallas_src>
import jax
import jax.numpy as jnp
from jax.experimental import pallas as pl
from jax.experimental.pallas import tpu as pltpu

LANE = 128      # padded out-channel width (lane-dense stores / matmul results)
SUBLANE = 8


def _round_up(x, m):
    return (x + m - 1) // m * m


def _pick_time_block(T, cap=8):
    """Largest divisor of T that is <= cap (static unroll length per grid step)."""
    for tb in range(min(T, cap), 0, -1):
        if T % tb == 0:
            return tb
    return 1


# ---------------------------------------------------------------------------
# Kernel 1: batched graph propagation A_hat @ X for all timesteps at once.
# X is presented as [N, T*F_in] so the O(N^2) matmul runs once with all
# timesteps packed along lanes instead of T skinny per-step matmuls.
# ---------------------------------------------------------------------------
def ax_precompute_kernel(a_ref, x_ref, o_ref):
    o_ref[...] = jnp.dot(
        a_ref[...], x_ref[...],
        preferred_element_type=jnp.float32).astype(o_ref.dtype)


# ---------------------------------------------------------------------------
# Kernel 2: the gated recurrence.  grid = (row_tiles, T // TB); the hidden
# state of the current row tile is carried across the time axis in a VMEM
# f32 scratch buffer.  Each grid step processes TB consecutive timesteps.
# ---------------------------------------------------------------------------
def tgcn_seq_kernel(ax_ref, h0_ref, wf_ref, bf_ref, l2zr_ref, l2h_ref,
                    o_ref, h_scr):
    tb = pl.program_id(1)
    fp = h_scr.shape[-1]
    n_steps = ax_ref.shape[0]            # TB (static)

    @pl.when(tb == 0)
    def _():
        h_scr[...] = h0_ref[...]

    # Hoist resident-operand loads out of the unrolled time loop.
    wf = wf_ref[...]          # [F_in, 3*fp]  bf16  (W@L1 fused, gate-stacked)
    bfu = bf_ref[...]         # [1, 3*fp]     f32   (bc@L1 + bl fused)
    l2zr = l2zr_ref[...]      # [fp, 2*fp]    bf16  (H-side of z|r linears)
    l2h = l2h_ref[...]        # [fp, fp]      bf16  (H*R-side of h linear)

    for s in range(n_steps):             # short static unrolled time loop
        H = h_scr[...]                   # [rows, fp]  f32
        AX = ax_ref[s]                   # [rows, F_in] bf16 (precomputed A@X_t)

        # Fused "GCN + conv-half of the gate linear" for all three gates.
        conv = jnp.dot(AX, wf, preferred_element_type=jnp.float32) + bfu

        # H-side halves of the z / r gate linears (one wide bf16 matmul).
        lin_zr = jnp.dot(H.astype(jnp.bfloat16), l2zr,
                         preferred_element_type=jnp.float32)
        Z = jax.nn.sigmoid(conv[:, :fp] + lin_zr[:, :fp])
        R = jax.nn.sigmoid(conv[:, fp:2 * fp] + lin_zr[:, fp:])

        pre_h = conv[:, 2 * fp:] + jnp.dot(
            (H * R).astype(jnp.bfloat16), l2h,
            preferred_element_type=jnp.float32)
        H_tilde = jnp.tanh(pre_h)

        H_new = H_tilde + Z * (H - H_tilde)     # == Z*H + (1-Z)*H_tilde
        h_scr[...] = H_new
        o_ref[s] = H_new.astype(o_ref.dtype)


@jax.jit
def tgcn_sequence(a_hat, x_seq, h0, w, bc, l1, l2, bl):
    """Run the T-GCN cell over a sequence.

    a_hat : [N, N]        dense normalized adjacency
    x_seq : [T, N, F_in]  node features per timestep
    h0    : [N, F_out]    initial hidden state
    w     : [3, F_in, F_out]    GCNConv weights (z, r, h)
    bc    : [3, F_out]          GCNConv biases
    l1    : [3, F_out, F_out]   Linear half acting on the conv output
    l2    : [3, F_out, F_out]   Linear half acting on H (or H*R for h-gate)
    bl    : [3, F_out]          Linear biases
    returns [T, N, F_out] hidden states (out[t] == module forward at step t).
    """
    T, n, f_in = x_seq.shape
    f_out = h0.shape[-1]
    f32, bf16 = jnp.float32, jnp.bfloat16

    fp = _round_up(f_out, LANE)
    row_tile = min(256, _round_up(n, SUBLANE))
    n_p = _round_up(n, row_tile)
    n_row_tiles = n_p // row_tile
    tbk = _pick_time_block(T)
    n_time_blocks = T // tbk

    # --- fold the conv-output half of each gate Linear into the GCN weights:
    #     conv[g]@L1[g] + bl[g] == (A@X) @ (W[g]@L1[g]) + (bc[g]@L1[g] + bl[g])
    wf_g = jnp.einsum('gio,gop->gip', w, l1)            # [3, F_in, F_out]
    bf_g = jnp.einsum('go,gop->gp', bc, l1) + bl        # [3, F_out]

    # --- wrapper-side layout plumbing: zero-pad, stack gates, cast to bf16 ---
    a_p = jnp.zeros((n_p, n_p), f32).at[:n, :n].set(a_hat).astype(bf16)
    x_p = jnp.zeros((T, n_p, f_in), f32).at[:, :n, :].set(x_seq).astype(bf16)
    h0_p = jnp.zeros((n_p, fp), f32).at[:n, :f_out].set(h0)

    wf_p = jnp.zeros((f_in, 3 * fp), f32)
    bf_p = jnp.zeros((1, 3 * fp), f32)
    l2zr_p = jnp.zeros((fp, 2 * fp), f32)
    for g in range(3):
        wf_p = wf_p.at[:, g * fp:g * fp + f_out].set(wf_g[g])
        bf_p = bf_p.at[0, g * fp:g * fp + f_out].set(bf_g[g])
    for g in range(2):
        l2zr_p = l2zr_p.at[:f_out, g * fp:g * fp + f_out].set(l2[g])
    l2h_p = jnp.zeros((fp, fp), f32).at[:f_out, :f_out].set(l2[2])
    wf_p = wf_p.astype(bf16)
    l2zr_p = l2zr_p.astype(bf16)
    l2h_p = l2h_p.astype(bf16)

    # --- hoist A @ X out of the recurrence: one batched matmul over all T ---
    x_flat = x_p.transpose(1, 0, 2).reshape(n_p, T * f_in)
    ax_flat = pl.pallas_call(
        ax_precompute_kernel,
        out_shape=jax.ShapeDtypeStruct((n_p, T * f_in), bf16),
        grid=(1,),
        in_specs=[pl.BlockSpec((n_p, n_p), lambda i: (0, 0)),
                  pl.BlockSpec((n_p, T * f_in), lambda i: (0, 0))],
        out_specs=pl.BlockSpec((n_p, T * f_in), lambda i: (0, 0)),
    )(a_p, x_flat)
    ax_seq = ax_flat.reshape(n_p, T, f_in).transpose(1, 0, 2)   # [T, n_p, F_in]

    def resident(shape):
        # Full-array block, constant index map -> stays resident in VMEM.
        return pl.BlockSpec(shape, lambda r, t, _s=len(shape): (0,) * _s)

    grid_spec = pltpu.PrefetchScalarGridSpec(
        num_scalar_prefetch=0,
        grid=(n_row_tiles, n_time_blocks),
        in_specs=[
            pl.BlockSpec((tbk, row_tile, f_in), lambda r, t: (t, r, 0)),  # AX_t
            pl.BlockSpec((row_tile, fp), lambda r, t: (r, 0)),            # H0
            resident((f_in, 3 * fp)),                                     # W@L1 fused (bf16)
            resident((1, 3 * fp)),                                        # fused bias
            resident((fp, 2 * fp)),                                       # L2 z|r (bf16)
            resident((fp, fp)),                                           # L2 h (bf16)
        ],
        out_specs=pl.BlockSpec((tbk, row_tile, fp), lambda r, t: (t, r, 0)),
        scratch_shapes=[pltpu.VMEM((row_tile, fp), jnp.float32)],         # carried H
    )

    out = pl.pallas_call(
        tgcn_seq_kernel,
        out_shape=jax.ShapeDtypeStruct((T, n_p, fp), bf16),
        grid_spec=grid_spec,
        compiler_params=pltpu.CompilerParams(
            # Node-row tiles are independent (A is gone) -> "parallel";
            # the time axis is a recurrence (H carried in scratch) -> "arbitrary".
            dimension_semantics=("parallel", "arbitrary")),
    )(ax_seq, h0_p, wf_p, bf_p, l2zr_p, l2h_p)

    return out[:, :n, :f_out].astype(f32)


def tgcn_cell(a_hat, x, h, w, bc, l1, l2, bl):
    """Exactly TGCN.forward(): a single gated update (T == 1 sequence)."""
    return tgcn_sequence(a_hat, x[None], h, w, bc, l1, l2, bl)[0]


def gcn_norm_dense(edge_index, edge_weight, num_nodes,
                   improved=False, add_self_loops=True):
    """Dense equivalent of PyG gcn_norm: A_hat = D^-1/2 (A + fill*I) D^-1/2."""
    fill = 2.0 if improved else 1.0
    src, dst = edge_index[0], edge_index[1]
    A = jnp.zeros((num_nodes, num_nodes), jnp.float32).at[dst, src].add(edge_weight)
    if add_self_loops:
        A = A + fill * jnp.eye(num_nodes, dtype=jnp.float32)
    deg = A.sum(axis=1)
    dinv = jnp.where(deg > 0.0, jax.lax.rsqrt(deg), 0.0)
    return dinv[:, None] * A * dinv[None, :]


def tgcn_ref_step(a_hat, x, h, w, bc, l1, l2, bl):
    """Pure-f32 JAX reference of one T-GCN cell step (matches the module)."""
    def gcn(g):
        return a_hat @ (x @ w[g]) + bc[g]

    def lin(g, left, right):
        return left @ l1[g] + right @ l2[g] + bl[g]

    Z = jax.nn.sigmoid(lin(0, gcn(0), h))
    R = jax.nn.sigmoid(lin(1, gcn(1), h))
    Ht = jnp.tanh(lin(2, gcn(2), h * R))
    return Z * h + (1.0 - Z) * Ht


if __name__ == "__main__":
    T = 8          # timesteps batched into one pallas_call
    N = 16         # graph nodes
    F_IN = 4       # in_channels
    F_OUT = 8      # out_channels
    E = 32         # edges

    key = jax.random.PRNGKey(0)
    (k_x, k_src, k_off, k_ew, k_w, k_bc, k_l1, k_l2, k_bl) = jax.random.split(key, 9)

    # Node features per timestep and a deterministic random graph.
    X_seq = jax.random.normal(k_x, (T, N, F_IN), dtype=jnp.float32)
    src = jax.random.randint(k_src, (E,), 0, N, dtype=jnp.int32)
    dst = (src + jax.random.randint(k_off, (E,), 1, N, dtype=jnp.int32)) % N
    edge_index = jnp.stack([src, dst], axis=0)                   # [2, E]
    edge_weight = jax.random.uniform(k_ew, (E,), dtype=jnp.float32) + 0.1

    # Hidden state H=None in the PyTorch module -> zeros.
    H0 = jnp.zeros((N, F_OUT), dtype=jnp.float32)

    # Synthetic parameters (shapes match the module's __init__).
    W = 0.2 * jax.random.normal(k_w, (3, F_IN, F_OUT), dtype=jnp.float32)
    BC = 0.05 * jax.random.normal(k_bc, (3, F_OUT), dtype=jnp.float32)
    # Linear(2*F_out -> F_out) split: L1 = W_lin[:, :F_out].T, L2 = W_lin[:, F_out:].T
    L1 = 0.2 * jax.random.normal(k_l1, (3, F_OUT, F_OUT), dtype=jnp.float32)
    L2 = 0.2 * jax.random.normal(k_l2, (3, F_OUT, F_OUT), dtype=jnp.float32)
    BL = 0.1 * jax.random.normal(k_bl, (3, F_OUT), dtype=jnp.float32)

    # Graph preprocessing (glue, plain JAX).
    A_hat = gcn_norm_dense(edge_index, edge_weight, N,
                           improved=False, add_self_loops=True)

    out = tgcn_sequence(A_hat, X_seq, H0, W, BC, L1, L2, BL)
    out = jax.block_until_ready(out)
    assert out.shape == (T, N, F_OUT)

    # Pure-f32 reference of the same recurrence.
    h = H0
    refs = []
    for t in range(T):
        h = tgcn_ref_step(A_hat, X_seq[t], h, W, BC, L1, L2, BL)
        refs.append(h)
    ref = jnp.stack(refs, axis=0)

    # bf16 operands on all matmuls + bf16 output writeback (f32 accumulation and
    # gate math) -> loosened tolerance vs. the pure-f32 reference.
    err = float(jnp.max(jnp.abs(out - ref)))
    assert err < 4e-2, f"kernel mismatch vs reference (max abs err {err})"

    print("KERNEL_OK")
</pallas_src>

<mosaic_0001>
module attributes {stable_mosaic.version = 11 : i64} {
  func.func @ax_precompute_kernel(%arg0: i32, %arg1: memref<16x16xbf16, #tpu.memory_space<vmem>>, %arg2: memref<16x32xbf16, #tpu.memory_space<vmem>>, %arg3: memref<16x32xbf16, #tpu.memory_space<vmem>>) attributes {dimension_semantics = [#tpu.dimension_semantics<arbitrary>], iteration_bounds = array<i64: 1>, scalar_prefetch = 0 : i64, scratch_operands = 0 : i64, tpu.core_type = #tpu.core_type<tc>, window_params = [{pipeline_mode = #tpu.pipeline_mode<synchronous>, transform_indices = @transform_0, window_bounds = array<i64: 16, 16>}, {pipeline_mode = #tpu.pipeline_mode<synchronous>, transform_indices = @transform_1, window_bounds = array<i64: 16, 32>}, {pipeline_mode = #tpu.pipeline_mode<synchronous>, transform_indices = @transform_2, window_bounds = array<i64: 16, 32>}]} {
    %c0 = arith.constant 0 : index
    %c0_0 = arith.constant 0 : index
    %0 = vector.load %arg1[%c0, %c0_0] : memref<16x16xbf16, #tpu.memory_space<vmem>>, vector<16x16xbf16>
    %c0_1 = arith.constant 0 : index
    %c0_2 = arith.constant 0 : index
    %1 = vector.load %arg2[%c0_1, %c0_2] : memref<16x32xbf16, #tpu.memory_space<vmem>>, vector<16x32xbf16>
    %cst = arith.constant dense<0.000000e+00> : vector<16x32xf32>
    %2 = tpu.matmul %0, %1, %cst {dimension_numbers = #tpu.dot_dimension_numbers<[1], [0], [0], [1], [0, 0, 1, 1], [], []>} : vector<16x16xbf16>, vector<16x32xbf16>, vector<16x32xf32> -> vector<16x32xf32>
    %3 = arith.truncf %2 : vector<16x32xf32> to vector<16x32xbf16>
    %c0_3 = arith.constant 0 : index
    %c0_4 = arith.constant 0 : index
    %4 = vector.load %arg3[%c0_3, %c0_4] : memref<16x32xbf16, #tpu.memory_space<vmem>>, vector<16x32xbf16>
    tpu.vector_store %arg3[%c0_3, %c0_4], %3 {strides = array<i32>} : memref<16x32xbf16, #tpu.memory_space<vmem>>, vector<16x32xbf16>,
    return
  }
  func.func @transform_0(%arg0: i32) -> (i32, i32) {
    %c0_i32 = arith.constant 0 : i32
    %c0_i32_0 = arith.constant 0 : i32
    %c0_i32_1 = arith.constant 0 : i32
    return %c0_i32, %c0_i32_0 : i32, i32
  }
  func.func @transform_1(%arg0: i32) -> (i32, i32) {
    %c0_i32 = arith.constant 0 : i32
    %c0_i32_0 = arith.constant 0 : i32
    %c0_i32_1 = arith.constant 0 : i32
    return %c0_i32, %c0_i32_0 : i32, i32
  }
  func.func @transform_2(%arg0: i32) -> (i32, i32) {
    %c0_i32 = arith.constant 0 : i32
    %c0_i32_0 = arith.constant 0 : i32
    %c0_i32_1 = arith.constant 0 : i32
    return %c0_i32, %c0_i32_0 : i32, i32
  }
}

module attributes {stable_mosaic.version = 11 : i64} {
  func.func @tgcn_seq_kernel(%arg0: i32, %arg1: i32, %arg2: memref<8x16x4xbf16, #tpu.memory_space<vmem>>, %arg3: memref<16x128xf32, #tpu.memory_space<vmem>>, %arg4: memref<4x384xbf16, #tpu.memory_space<vmem>>, %arg5: memref<1x384xf32, #tpu.memory_space<vmem>>, %arg6: memref<128x256xbf16, #tpu.memory_space<vmem>>, %arg7: memref<128x128xbf16, #tpu.memory_space<vmem>>, %arg8: memref<8x16x128xbf16, #tpu.memory_space<vmem>>, %arg9: memref<16x128xf32, #tpu.memory_space<vmem>>) attributes {dimension_semantics = [#tpu.dimension_semantics<parallel>, #tpu.dimension_semantics<arbitrary>], iteration_bounds = array<i64: 1, 1>, scalar_prefetch = 0 : i64, scratch_operands = 1 : i64, tpu.core_type = #tpu.core_type<tc>, window_params = [{transform_indices = @transform_0, window_bounds = array<i64: 8, 16, 4>}, {transform_indices = @transform_1, window_bounds = array<i64: 16, 128>}, {pipeline_mode = #tpu.pipeline_mode<synchronous>, transform_indices = @transform_2, window_bounds = array<i64: 4, 384>}, {pipeline_mode = #tpu.pipeline_mode<synchronous>, transform_indices = @transform_3, window_bounds = array<i64: 1, 384>}, {pipeline_mode = #tpu.pipeline_mode<synchronous>, transform_indices = @transform_4, window_bounds = array<i64: 128, 256>}, {pipeline_mode = #tpu.pipeline_mode<synchronous>, transform_indices = @transform_5, window_bounds = array<i64: 128, 128>}, {transform_indices = @transform_6, window_bounds = array<i64: 8, 16, 128>}]} {
    %c0_i32 = arith.constant 0 : i32
    %0 = arith.cmpi eq, %arg1, %c0_i32 : i32
    %1 = arith.extui %0 : i1 to i32
    %c0_i32_0 = arith.constant 0 : i32
    %2 = arith.cmpi ne, %1, %c0_i32_0 : i32
    scf.if %2 {
      %c0_120 = arith.constant 0 : index
      %c0_121 = arith.constant 0 : index
      %311 = vector.load %arg3[%c0_120, %c0_121] : memref<16x128xf32, #tpu.memory_space<vmem>>, vector<16x128xf32>
      %c0_122 = arith.constant 0 : index
      %c0_123 = arith.constant 0 : index
      %312 = vector.load %arg9[%c0_122, %c0_123] : memref<16x128xf32, #tpu.memory_space<vmem>>, vector<16x128xf32>
      tpu.vector_store %arg9[%c0_122, %c0_123], %311 {strides = array<i32>} : memref<16x128xf32, #tpu.memory_space<vmem>>, vector<16x128xf32>,
    } else {
    }
    %c0 = arith.constant 0 : index
    %c0_1 = arith.constant 0 : index
    %3 = vector.load %arg4[%c0, %c0_1] : memref<4x384xbf16, #tpu.memory_space<vmem>>, vector<4x384xbf16>
    %c0_2 = arith.constant 0 : index
    %c0_3 = arith.constant 0 : index
    %4 = vector.load %arg5[%c0_2, %c0_3] : memref<1x384xf32, #tpu.memory_space<vmem>>, vector<1x384xf32>
    %c0_4 = arith.constant 0 : index
    %c0_5 = arith.constant 0 : index
    %5 = vector.load %arg6[%c0_4, %c0_5] : memref<128x256xbf16, #tpu.memory_space<vmem>>, vector<128x256xbf16>
    %c0_6 = arith.constant 0 : index
    %c0_7 = arith.constant 0 : index
    %6 = vector.load %arg7[%c0_6, %c0_7] : memref<128x128xbf16, #tpu.memory_space<vmem>>, vector<128x128xbf16>
    %c0_8 = arith.constant 0 : index
    %c0_9 = arith.constant 0 : index
    %7 = vector.load %arg9[%c0_8, %c0_9] : memref<16x128xf32, #tpu.memory_space<vmem>>, vector<16x128xf32>
    %c0_10 = arith.constant 0 : index
    %c0_11 = arith.constant 0 : index
    %c0_12 = arith.constant 0 : index
    %8 = vector.load %arg2[%c0_10, %c0_11, %c0_12] : memref<8x16x4xbf16, #tpu.memory_space<vmem>>, vector<1x16x4xbf16>
    %9 = vector.shape_cast %8 : vector<1x16x4xbf16> to vector<16x4xbf16>
    %cst = arith.constant dense<0.000000e+00> : vector<16x384xf32>
    %10 = tpu.matmul %9, %3, %cst {dimension_numbers = #tpu.dot_dimension_numbers<[1], [0], [0], [1], [0, 0, 1, 1], [], []>} : vector<16x4xbf16>, vector<4x384xbf16>, vector<16x384xf32> -> vector<16x384xf32>
    %11 = vector.broadcast %4 : vector<1x384xf32> to vector<16x384xf32>
    %12 = arith.addf %10, %11 : vector<16x384xf32>
    %13 = arith.truncf %7 : vector<16x128xf32> to vector<16x128xbf16>
    %cst_13 = arith.constant dense<0.000000e+00> : vector<16x256xf32>
    %14 = tpu.matmul %13, %5, %cst_13 {dimension_numbers = #tpu.dot_dimension_numbers<[1], [0], [0], [1], [0, 0, 1, 1], [], []>} : vector<16x128xbf16>, vector<128x256xbf16>, vector<16x256xf32> -> vector<16x256xf32>
    %15 = vector.extract_strided_slice %12 {offsets = [0, 0], sizes = [16, 128], strides = [1, 1]} : vector<16x384xf32> to vector<16x128xf32>
    %16 = vector.extract_strided_slice %14 {offsets = [0, 0], sizes = [16, 128], strides = [1, 1]} : vector<16x256xf32> to vector<16x128xf32>
    %17 = arith.addf %15, %16 : vector<16x128xf32>
    %18 = arith.negf %17 : vector<16x128xf32>
    %19 = math.exp %18 : vector<16x128xf32>
    %cst_14 = arith.constant 1.000000e+00 : f32
    %20 = vector.broadcast %cst_14 : f32 to vector<16x128xf32>
    %21 = arith.addf %20, %19 : vector<16x128xf32>
    %22 = arith.divf %20, %21 : vector<16x128xf32>
    %23 = vector.extract_strided_slice %12 {offsets = [0, 128], sizes = [16, 128], strides = [1, 1]} : vector<16x384xf32> to vector<16x128xf32>
    %24 = vector.extract_strided_slice %14 {offsets = [0, 128], sizes = [16, 128], strides = [1, 1]} : vector<16x256xf32> to vector<16x128xf32>
    %25 = arith.addf %23, %24 : vector<16x128xf32>
    %26 = arith.negf %25 : vector<16x128xf32>
    %27 = math.exp %26 : vector<16x128xf32>
    %cst_15 = arith.constant 1.000000e+00 : f32
    %28 = vector.broadcast %cst_15 : f32 to vector<16x128xf32>
    %29 = arith.addf %28, %27 : vector<16x128xf32>
    %30 = arith.divf %28, %29 : vector<16x128xf32>
    %31 = vector.extract_strided_slice %12 {offsets = [0, 256], sizes = [16, 128], strides = [1, 1]} : vector<16x384xf32> to vector<16x128xf32>
    %32 = arith.mulf %7, %30 : vector<16x128xf32>
    %33 = arith.truncf %32 : vector<16x128xf32> to vector<16x128xbf16>
    %cst_16 = arith.constant dense<0.000000e+00> : vector<16x128xf32>
    %34 = tpu.matmul %33, %6, %cst_16 {dimension_numbers = #tpu.dot_dimension_numbers<[1], [0], [0], [1], [0, 0, 1, 1], [], []>} : vector<16x128xbf16>, vector<128x128xbf16>, vector<16x128xf32> -> vector<16x128xf32>
    %35 = arith.addf %31, %34 : vector<16x128xf32>
    %36 = math.tanh %35 : vector<16x128xf32>
    %37 = arith.subf %7, %36 : vector<16x128xf32>
    %38 = arith.mulf %22, %37 : vector<16x128xf32>
    %39 = arith.addf %36, %38 : vector<16x128xf32>
    %c0_17 = arith.constant 0 : index
    %c0_18 = arith.constant 0 : index
    %40 = vector.load %arg9[%c0_17, %c0_18] : memref<16x128xf32, #tpu.memory_space<vmem>>, vector<16x128xf32>
    tpu.vector_store %arg9[%c0_17, %c0_18], %39 {strides = array<i32>} : memref<16x128xf32, #tpu.memory_space<vmem>>, vector<16x128xf32>,
    %41 = arith.truncf %39 : vector<16x128xf32> to vector<16x128xbf16>
    %c0_19 = arith.constant 0 : index
    %c0_20 = arith.constant 0 : index
    %c0_21 = arith.constant 0 : index
    %42 = vector.load %arg8[%c0_19, %c0_20, %c0_21] : memref<8x16x128xbf16, #tpu.memory_space<vmem>>, vector<1x16x128xbf16>
    %43 = vector.shape_cast %42 : vector<1x16x128xbf16> to vector<16x128xbf16>
    %44 = vector.shape_cast %41 : vector<16x128xbf16> to vector<1x16x128xbf16>
    tpu.vector_store %arg8[%c0_19, %c0_20, %c0_21], %44 {strides = array<i32>} : memref<8x16x128xbf16, #tpu.memory_space<vmem>>, vector<1x16x128xbf16>,
    %c0_22 = arith.constant 0 : index
    %c0_23 = arith.constant 0 : index
    %45 = vector.load %arg9[%c0_22, %c0_23] : memref<16x128xf32, #tpu.memory_space<vmem>>, vector<16x128xf32>
    %c1 = arith.constant 1 : index
    %c0_24 = arith.constant 0 : index
    %c0_25 = arith.constant 0 : index
    %46 = vector.load %arg2[%c1, %c0_24, %c0_25] : memref<8x16x4xbf16, #tpu.memory_space<vmem>>, vector<1x16x4xbf16>
    %47 = vector.shape_cast %46 : vector<1x16x4xbf16> to vector<16x4xbf16>
    %cst_26 = arith.constant dense<0.000000e+00> : vector<16x384xf32>
    %48 = tpu.matmul %47, %3, %cst_26 {dimension_numbers = #tpu.dot_dimension_numbers<[1], [0], [0], [1], [0, 0, 1, 1], [], []>} : vector<16x4xbf16>, vector<4x384xbf16>, vector<16x384xf32> -> vector<16x384xf32>
    %49 = vector.broadcast %4 : vector<1x384xf32> to vector<16x384xf32>
    %50 = arith.addf %48, %49 : vector<16x384xf32>
    %51 = arith.truncf %45 : vector<16x128xf32> to vector<16x128xbf16>
    %cst_27 = arith.constant dense<0.000000e+00> : vector<16x256xf32>
    %52 = tpu.matmul %51, %5, %cst_27 {dimension_numbers = #tpu.dot_dimension_numbers<[1], [0], [0], [1], [0, 0, 1, 1], [], []>} : vector<16x128xbf16>, vector<128x256xbf16>, vector<16x256xf32> -> vector<16x256xf32>
    %53 = vector.extract_strided_slice %50 {offsets = [0, 0], sizes = [16, 128], strides = [1, 1]} : vector<16x384xf32> to vector<16x128xf32>
    %54 = vector.extract_strided_slice %52 {offsets = [0, 0], sizes = [16, 128], strides = [1, 1]} : vector<16x256xf32> to vector<16x128xf32>
    %55 = arith.addf %53, %54 : vector<16x128xf32>
    %56 = arith.negf %55 : vector<16x128xf32>
    %57 = math.exp %56 : vector<16x128xf32>
    %cst_28 = arith.constant 1.000000e+00 : f32
    %58 = vector.broadcast %cst_28 : f32 to vector<16x128xf32>
    %59 = arith.addf %58, %57 : vector<16x128xf32>
    %60 = arith.divf %58, %59 : vector<16x128xf32>
    %61 = vector.extract_strided_slice %50 {offsets = [0, 128], sizes = [16, 128], strides = [1, 1]} : vector<16x384xf32> to vector<16x128xf32>
    %62 = vector.extract_strided_slice %52 {offsets = [0, 128], sizes = [16, 128], strides = [1, 1]} : vector<16x256xf32> to vector<16x128xf32>
    %63 = arith.addf %61, %62 : vector<16x128xf32>
    %64 = arith.negf %63 : vector<16x128xf32>
    %65 = math.exp %64 : vector<16x128xf32>
    %cst_29 = arith.constant 1.000000e+00 : f32
    %66 = vector.broadcast %cst_29 : f32 to vector<16x128xf32>
    %67 = arith.addf %66, %65 : vector<16x128xf32>
    %68 = arith.divf %66, %67 : vector<16x128xf32>
    %69 = vector.extract_strided_slice %50 {offsets = [0, 256], sizes = [16, 128], strides = [1, 1]} : vector<16x384xf32> to vector<16x128xf32>
    %70 = arith.mulf %45, %68 : vector<16x128xf32>
    %71 = arith.truncf %70 : vector<16x128xf32> to vector<16x128xbf16>
    %cst_30 = arith.constant dense<0.000000e+00> : vector<16x128xf32>
    %72 = tpu.matmul %71, %6, %cst_30 {dimension_numbers = #tpu.dot_dimension_numbers<[1], [0], [0], [1], [0, 0, 1, 1], [], []>} : vector<16x128xbf16>, vector<128x128xbf16>, vector<16x128xf32> -> vector<16x128xf32>
    %73 = arith.addf %69, %72 : vector<16x128xf32>
    %74 = math.tanh %73 : vector<16x128xf32>
    %75 = arith.subf %45, %74 : vector<16x128xf32>
    %76 = arith.mulf %60, %75 : vector<16x128xf32>
    %77 = arith.addf %74, %76 : vector<16x128xf32>
    %c0_31 = arith.constant 0 : index
    %c0_32 = arith.constant 0 : index
    %78 = vector.load %arg9[%c0_31, %c0_32] : memref<16x128xf32, #tpu.memory_space<vmem>>, vector<16x128xf32>
    tpu.vector_store %arg9[%c0_31, %c0_32], %77 {strides = array<i32>} : memref<16x128xf32, #tpu.memory_space<vmem>>, vector<16x128xf32>,
    %79 = arith.truncf %77 : vector<16x128xf32> to vector<16x128xbf16>
    %c1_33 = arith.constant 1 : index
    %c0_34 = arith.constant 0 : index
    %c0_35 = arith.constant 0 : index
    %80 = vector.load %arg8[%c1_33, %c0_34, %c0_35] : memref<8x16x128xbf16, #tpu.memory_space<vmem>>, vector<1x16x128xbf16>
    %81 = vector.shape_cast %80 : vector<1x16x128xbf16> to vector<16x128xbf16>
    %82 = vector.shape_cast %79 : vector<16x128xbf16> to vector<1x16x128xbf16>
    tpu.vector_store %arg8[%c1_33, %c0_34, %c0_35], %82 {strides = array<i32>} : memref<8x16x128xbf16, #tpu.memory_space<vmem>>, vector<1x16x128xbf16>,
    %c0_36 = arith.constant 0 : index
    %c0_37 = arith.constant 0 : index
    %83 = vector.load %arg9[%c0_36, %c0_37] : memref<16x128xf32, #tpu.memory_space<vmem>>, vector<16x128xf32>
    %c2 = arith.constant 2 : index
    %c0_38 = arith.constant 0 : index
    %c0_39 = arith.constant 0 : index
    %84 = vector.load %arg2[%c2, %c0_38, %c0_39] : memref<8x16x4xbf16, #tpu.memory_space<vmem>>, vector<1x16x4xbf16>
    %85 = vector.shape_cast %84 : vector<1x16x4xbf16> to vector<16x4xbf16>
    %cst_40 = arith.constant dense<0.000000e+00> : vector<16x384xf32>
    %86 = tpu.matmul %85, %3, %cst_40 {dimension_numbers = #tpu.dot_dimension_numbers<[1], [0], [0], [1], [0, 0, 1, 1], [], []>} : vector<16x4xbf16>, vector<4x384xbf16>, vector<16x384xf32> -> vector<16x384xf32>
    %87 = vector.broadcast %4 : vector<1x384xf32> to vector<16x384xf32>
    %88 = arith.addf %86, %87 : vector<16x384xf32>
    %89 = arith.truncf %83 : vector<16x128xf32> to vector<16x128xbf16>
    %cst_41 = arith.constant dense<0.000000e+00> : vector<16x256xf32>
    %90 = tpu.matmul %89, %5, %cst_41 {dimension_numbers = #tpu.dot_dimension_numbers<[1], [0], [0], [1], [0, 0, 1, 1], [], []>} : vector<16x128xbf16>, vector<128x256xbf16>, vector<16x256xf32> -> vector<16x256xf32>
    %91 = vector.extract_strided_slice %88 {offsets = [0, 0], sizes = [16, 128], strides = [1, 1]} : vector<16x384xf32> to vector<16x128xf32>
    %92 = vector.extract_strided_slice %90 {offsets = [0, 0], sizes = [16, 128], strides = [1, 1]} : vector<16x256xf32> to vector<16x128xf32>
    %93 = arith.addf %91, %92 : vector<16x128xf32>
    %94 = arith.negf %93 : vector<16x128xf32>
    %95 = math.exp %94 : vector<16x128xf32>
    %cst_42 = arith.constant 1.000000e+00 : f32
    %96 = vector.broadcast %cst_42 : f32 to vector<16x128xf32>
    %97 = arith.addf %96, %95 : vector<16x128xf32>
    %98 = arith.divf %96, %97 : vector<16x128xf32>
    %99 = vector.extract_strided_slice %88 {offsets = [0, 128], sizes = [16, 128], strides = [1, 1]} : vector<16x384xf32> to vector<16x128xf32>
    %100 = vector.extract_strided_slice %90 {offsets = [0, 128], sizes = [16, 128], strides = [1, 1]} : vector<16x256xf32> to vector<16x128xf32>
    %101 = arith.addf %99, %100 : vector<16x128xf32>
    %102 = arith.negf %101 : vector<16x128xf32>
    %103 = math.exp %102 : vector<16x128xf32>
    %cst_43 = arith.constant 1.000000e+00 : f32
    %104 = vector.broadcast %cst_43 : f32 to vector<16x128xf32>
    %105 = arith.addf %104, %103 : vector<16x128xf32>
    %106 = arith.divf %104, %105 : vector<16x128xf32>
    %107 = vector.extract_strided_slice %88 {offsets = [0, 256], sizes = [16, 128], strides = [1, 1]} : vector<16x384xf32> to vector<16x128xf32>
    %108 = arith.mulf %83, %106 : vector<16x128xf32>
    %109 = arith.truncf %108 : vector<16x128xf32> to vector<16x128xbf16>
    %cst_44 = arith.constant dense<0.000000e+00> : vector<16x128xf32>
    %110 = tpu.matmul %109, %6, %cst_44 {dimension_numbers = #tpu.dot_dimension_numbers<[1], [0], [0], [1], [0, 0, 1, 1], [], []>} : vector<16x128xbf16>, vector<128x128xbf16>, vector<16x128xf32> -> vector<16x128xf32>
    %111 = arith.addf %107, %110 : vector<16x128xf32>
    %112 = math.tanh %111 : vector<16x128xf32>
    %113 = arith.subf %83, %112 : vector<16x128xf32>
    %114 = arith.mulf %98, %113 : vector<16x128xf32>
    %115 = arith.addf %112, %114 : vector<16x128xf32>
    %c0_45 = arith.constant 0 : index
    %c0_46 = arith.constant 0 : index
    %116 = vector.load %arg9[%c0_45, %c0_46] : memref<16x128xf32, #tpu.memory_space<vmem>>, vector<16x128xf32>
    tpu.vector_store %arg9[%c0_45, %c0_46], %115 {strides = array<i32>} : memref<16x128xf32, #tpu.memory_space<vmem>>, vector<16x128xf32>,
    %117 = arith.truncf %115 : vector<16x128xf32> to vector<16x128xbf16>
    %c2_47 = arith.constant 2 : index
    %c0_48 = arith.constant 0 : index
    %c0_49 = arith.constant 0 : index
    %118 = vector.load %arg8[%c2_47, %c0_48, %c0_49] : memref<8x16x128xbf16, #tpu.memory_space<vmem>>, vector<1x16x128xbf16>
    %119 = vector.shape_cast %118 : vector<1x16x128xbf16> to vector<16x128xbf16>
    %120 = vector.shape_cast %117 : vector<16x128xbf16> to vector<1x16x128xbf16>
    tpu.vector_store %arg8[%c2_47, %c0_48, %c0_49], %120 {strides = array<i32>} : memref<8x16x128xbf16, #tpu.memory_space<vmem>>, vector<1x16x128xbf16>,
    %c0_50 = arith.constant 0 : index
    %c0_51 = arith.constant 0 : index
    %121 = vector.load %arg9[%c0_50, %c0_51] : memref<16x128xf32, #tpu.memory_space<vmem>>, vector<16x128xf32>
    %c3 = arith.constant 3 : index
    %c0_52 = arith.constant 0 : index
    %c0_53 = arith.constant 0 : index
    %122 = vector.load %arg2[%c3, %c0_52, %c0_53] : memref<8x16x4xbf16, #tpu.memory_space<vmem>>, vector<1x16x4xbf16>
    %123 = vector.shape_cast %122 : vector<1x16x4xbf16> to vector<16x4xbf16>
    %cst_54 = arith.constant dense<0.000000e+00> : vector<16x384xf32>
    %124 = tpu.matmul %123, %3, %cst_54 {dimension_numbers = #tpu.dot_dimension_numbers<[1], [0], [0], [1], [0, 0, 1, 1], [], []>} : vector<16x4xbf16>, vector<4x384xbf16>, vector<16x384xf32> -> vector<16x384xf32>
    %125 = vector.broadcast %4 : vector<1x384xf32> to vector<16x384xf32>
    %126 = arith.addf %124, %125 : vector<16x384xf32>
    %127 = arith.truncf %121 : vector<16x128xf32> to vector<16x128xbf16>
    %cst_55 = arith.constant dense<0.000000e+00> : vector<16x256xf32>
    %128 = tpu.matmul %127, %5, %cst_55 {dimension_numbers = #tpu.dot_dimension_numbers<[1], [0], [0], [1], [0, 0, 1, 1], [], []>} : vector<16x128xbf16>, vector<128x256xbf16>, vector<16x256xf32> -> vector<16x256xf32>
    %129 = vector.extract_strided_slice %126 {offsets = [0, 0], sizes = [16, 128], strides = [1, 1]} : vector<16x384xf32> to vector<16x128xf32>
    %130 = vector.extract_strided_slice %128 {offsets = [0, 0], sizes = [16, 128], strides = [1, 1]} : vector<16x256xf32> to vector<16x128xf32>
    %131 = arith.addf %129, %130 : vector<16x128xf32>
    %132 = arith.negf %131 : vector<16x128xf32>
    %133 = math.exp %132 : vector<16x128xf32>
    %cst_56 = arith.constant 1.000000e+00 : f32
    %134 = vector.broadcast %cst_56 : f32 to vector<16x128xf32>
    %135 = arith.addf %134, %133 : vector<16x128xf32>
    %136 = arith.divf %134, %135 : vector<16x128xf32>
    %137 = vector.extract_strided_slice %126 {offsets = [0, 128], sizes = [16, 128], strides = [1, 1]} : vector<16x384xf32> to vector<16x128xf32>
    %138 = vector.extract_strided_slice %128 {offsets = [0, 128], sizes = [16, 128], strides = [1, 1]} : vector<16x256xf32> to vector<16x128xf32>
    %139 = arith.addf %137, %138 : vector<16x128xf32>
    %140 = arith.negf %139 : vector<16x128xf32>
    %141 = math.exp %140 : vector<16x128xf32>
    %cst_57 = arith.constant 1.000000e+00 : f32
    %142 = vector.broadcast %cst_57 : f32 to vector<16x128xf32>
    %143 = arith.addf %142, %141 : vector<16x128xf32>
    %144 = arith.divf %142, %143 : vector<16x128xf32>
    %145 = vector.extract_strided_slice %126 {offsets = [0, 256], sizes = [16, 128], strides = [1, 1]} : vector<16x384xf32> to vector<16x128xf32>
    %146 = arith.mulf %121, %144 : vector<16x128xf32>
    %147 = arith.truncf %146 : vector<16x128xf32> to vector<16x128xbf16>
    %cst_58 = arith.constant dense<0.000000e+00> : vector<16x128xf32>
    %148 = tpu.matmul %147, %6, %cst_58 {dimension_numbers = #tpu.dot_dimension_numbers<[1], [0], [0], [1], [0, 0, 1, 1], [], []>} : vector<16x128xbf16>, vector<128x128xbf16>, vector<16x128xf32> -> vector<16x128xf32>
    %149 = arith.addf %145, %148 : vector<16x128xf32>
    %150 = math.tanh %149 : vector<16x128xf32>
    %151 = arith.subf %121, %150 : vector<16x128xf32>
    %152 = arith.mulf %136, %151 : vector<16x128xf32>
    %153 = arith.addf %150, %152 : vector<16x128xf32>
    %c0_59 = arith.constant 0 : index
    %c0_60 = arith.constant 0 : index
    %154 = vector.load %arg9[%c0_59, %c0_60] : memref<16x128xf32, #tpu.memory_space<vmem>>, vector<16x128xf32>
    tpu.vector_store %arg9[%c0_59, %c0_60], %153 {strides = array<i32>} : memref<16x128xf32, #tpu.memory_space<vmem>>, vector<16x128xf32>,
    %155 = arith.truncf %153 : vector<16x128xf32> to vector<16x128xbf16>
    %c3_61 = arith.constant 3 : index
    %c0_62 = arith.constant 0 : index
    %c0_63 = arith.constant 0 : index
    %156 = vector.load %arg8[%c3_61, %c0_62, %c0_63] : memref<8x16x128xbf16, #tpu.memory_space<vmem>>, vector<1x16x128xbf16>
    %157 = vector.shape_cast %156 : vector<1x16x128xbf16> to vector<16x128xbf16>
    %158 = vector.shape_cast %155 : vector<16x128xbf16> to vector<1x16x128xbf16>
    tpu.vector_store %arg8[%c3_61, %c0_62, %c0_63], %158 {strides = array<i32>} : memref<8x16x128xbf16, #tpu.memory_space<vmem>>, vector<1x16x128xbf16>,
    %c0_64 = arith.constant 0 : index
    %c0_65 = arith.constant 0 : index
    %159 = vector.load %arg9[%c0_64, %c0_65] : memref<16x128xf32, #tpu.memory_space<vmem>>, vector<16x128xf32>
    %c4 = arith.constant 4 : index
    %c0_66 = arith.constant 0 : index
    %c0_67 = arith.constant 0 : index
    %160 = vector.load %arg2[%c4, %c0_66, %c0_67] : memref<8x16x4xbf16, #tpu.memory_space<vmem>>, vector<1x16x4xbf16>
    %161 = vector.shape_cast %160 : vector<1x16x4xbf16> to vector<16x4xbf16>
    %cst_68 = arith.constant dense<0.000000e+00> : vector<16x384xf32>
    %162 = tpu.matmul %161, %3, %cst_68 {dimension_numbers = #tpu.dot_dimension_numbers<[1], [0], [0], [1], [0, 0, 1, 1], [], []>} : vector<16x4xbf16>, vector<4x384xbf16>, vector<16x384xf32> -> vector<16x384xf32>
    %163 = vector.broadcast %4 : vector<1x384xf32> to vector<16x384xf32>
    %164 = arith.addf %162, %163 : vector<16x384xf32>
    %165 = arith.truncf %159 : vector<16x128xf32> to vector<16x128xbf16>
    %cst_69 = arith.constant dense<0.000000e+00> : vector<16x256xf32>
    %166 = tpu.matmul %165, %5, %cst_69 {dimension_numbers = #tpu.dot_dimension_numbers<[1], [0], [0], [1], [0, 0, 1, 1], [], []>} : vector<16x128xbf16>, vector<128x256xbf16>, vector<16x256xf32> -> vector<16x256xf32>
    %167 = vector.extract_strided_slice %164 {offsets = [0, 0], sizes = [16, 128], strides = [1, 1]} : vector<16x384xf32> to vector<16x128xf32>
    %168 = vector.extract_strided_slice %166 {offsets = [0, 0], sizes = [16, 128], strides = [1, 1]} : vector<16x256xf32> to vector<16x128xf32>
    %169 = arith.addf %167, %168 : vector<16x128xf32>
    %170 = arith.negf %169 : vector<16x128xf32>
    %171 = math.exp %170 : vector<16x128xf32>
    %cst_70 = arith.constant 1.000000e+00 : f32
    %172 = vector.broadcast %cst_70 : f32 to vector<16x128xf32>
    %173 = arith.addf %172, %171 : vector<16x128xf32>
    %174 = arith.divf %172, %173 : vector<16x128xf32>
    %175 = vector.extract_strided_slice %164 {offsets = [0, 128], sizes = [16, 128], strides = [1, 1]} : vector<16x384xf32> to vector<16x128xf32>
    %176 = vector.extract_strided_slice %166 {offsets = [0, 128], sizes = [16, 128], strides = [1, 1]} : vector<16x256xf32> to vector<16x128xf32>
    %177 = arith.addf %175, %176 : vector<16x128xf32>
    %178 = arith.negf %177 : vector<16x128xf32>
    %179 = math.exp %178 : vector<16x128xf32>
    %cst_71 = arith.constant 1.000000e+00 : f32
    %180 = vector.broadcast %cst_71 : f32 to vector<16x128xf32>
    %181 = arith.addf %180, %179 : vector<16x128xf32>
    %182 = arith.divf %180, %181 : vector<16x128xf32>
    %183 = vector.extract_strided_slice %164 {offsets = [0, 256], sizes = [16, 128], strides = [1, 1]} : vector<16x384xf32> to vector<16x128xf32>
    %184 = arith.mulf %159, %182 : vector<16x128xf32>
    %185 = arith.truncf %184 : vector<16x128xf32> to vector<16x128xbf16>
    %cst_72 = arith.constant dense<0.000000e+00> : vector<16x128xf32>
    %186 = tpu.matmul %185, %6, %cst_72 {dimension_numbers = #tpu.dot_dimension_numbers<[1], [0], [0], [1], [0, 0, 1, 1], [], []>} : vector<16x128xbf16>, vector<128x128xbf16>, vector<16x128xf32> -> vector<16x128xf32>
    %187 = arith.addf %183, %186 : vector<16x128xf32>
    %188 = math.tanh %187 : vector<16x128xf32>
    %189 = arith.subf %159, %188 : vector<16x128xf32>
    %190 = arith.mulf %174, %189 : vector<16x128xf32>
    %191 = arith.addf %188, %190 : vector<16x128xf32>
    %c0_73 = arith.constant 0 : index
    %c0_74 = arith.constant 0 : index
    %192 = vector.load %arg9[%c0_73, %c0_74] : memref<16x128xf32, #tpu.memory_space<vmem>>, vector<16x128xf32>
    tpu.vector_store %arg9[%c0_73, %c0_74], %191 {strides = array<i32>} : memref<16x128xf32, #tpu.memory_space<vmem>>, vector<16x128xf32>,
    %193 = arith.truncf %191 : vector<16x128xf32> to vector<16x128xbf16>
    %c4_75 = arith.constant 4 : index
    %c0_76 = arith.constant 0 : index
    %c0_77 = arith.constant 0 : index
    %194 = vector.load %arg8[%c4_75, %c0_76, %c0_77] : memref<8x16x128xbf16, #tpu.memory_space<vmem>>, vector<1x16x128xbf16>
    %195 = vector.shape_cast %194 : vector<1x16x128xbf16> to vector<16x128xbf16>
    %196 = vector.shape_cast %193 : vector<16x128xbf16> to vector<1x16x128xbf16>
    tpu.vector_store %arg8[%c4_75, %c0_76, %c0_77], %196 {strides = array<i32>} : memref<8x16x128xbf16, #tpu.memory_space<vmem>>, vector<1x16x128xbf16>,
    %c0_78 = arith.constant 0 : index
    %c0_79 = arith.constant 0 : index
    %197 = vector.load %arg9[%c0_78, %c0_79] : memref<16x128xf32, #tpu.memory_space<vmem>>, vector<16x128xf32>
    %c5 = arith.constant 5 : index
    %c0_80 = arith.constant 0 : index
    %c0_81 = arith.constant 0 : index
    %198 = vector.load %arg2[%c5, %c0_80, %c0_81] : memref<8x16x4xbf16, #tpu.memory_space<vmem>>, vector<1x16x4xbf16>
    %199 = vector.shape_cast %198 : vector<1x16x4xbf16> to vector<16x4xbf16>
    %cst_82 = arith.constant dense<0.000000e+00> : vector<16x384xf32>
    %200 = tpu.matmul %199, %3, %cst_82 {dimension_numbers = #tpu.dot_dimension_numbers<[1], [0], [0], [1], [0, 0, 1, 1], [], []>} : vector<16x4xbf16>, vector<4x384xbf16>, vector<16x384xf32> -> vector<16x384xf32>
    %201 = vector.broadcast %4 : vector<1x384xf32> to vector<16x384xf32>
    %202 = arith.addf %200, %201 : vector<16x384xf32>
    %203 = arith.truncf %197 : vector<16x128xf32> to vector<16x128xbf16>
    %cst_83 = arith.constant dense<0.000000e+00> : vector<16x256xf32>
    %204 = tpu.matmul %203, %5, %cst_83 {dimension_numbers = #tpu.dot_dimension_numbers<[1], [0], [0], [1], [0, 0, 1, 1], [], []>} : vector<16x128xbf16>, vector<128x256xbf16>, vector<16x256xf32> -> vector<16x256xf32>
    %205 = vector.extract_strided_slice %202 {offsets = [0, 0], sizes = [16, 128], strides = [1, 1]} : vector<16x384xf32> to vector<16x128xf32>
    %206 = vector.extract_strided_slice %204 {offsets = [0, 0], sizes = [16, 128], strides = [1, 1]} : vector<16x256xf32> to vector<16x128xf32>
    %207 = arith.addf %205, %206 : vector<16x128xf32>
    %208 = arith.negf %207 : vector<16x128xf32>
    %209 = math.exp %208 : vector<16x128xf32>
    %cst_84 = arith.constant 1.000000e+00 : f32
    %210 = vector.broadcast %cst_84 : f32 to vector<16x128xf32>
    %211 = arith.addf %210, %209 : vector<16x128xf32>
    %212 = arith.divf %210, %211 : vector<16x128xf32>
    %213 = vector.extract_strided_slice %202 {offsets = [0, 128], sizes = [16, 128], strides = [1, 1]} : vector<16x384xf32> to vector<16x128xf32>
    %214 = vector.extract_strided_slice %204 {offsets = [0, 128], sizes = [16, 128], strides = [1, 1]} : vector<16x256xf32> to vector<16x128xf32>
    %215 = arith.addf %213, %214 : vector<16x128xf32>
    %216 = arith.negf %215 : vector<16x128xf32>
    %217 = math.exp %216 : vector<16x128xf32>
    %cst_85 = arith.constant 1.000000e+00 : f32
    %218 = vector.broadcast %cst_85 : f32 to vector<16x128xf32>
    %219 = arith.addf %218, %217 : vector<16x128xf32>
    %220 = arith.divf %218, %219 : vector<16x128xf32>
    %221 = vector.extract_strided_slice %202 {offsets = [0, 256], sizes = [16, 128], strides = [1, 1]} : vector<16x384xf32> to vector<16x128xf32>
    %222 = arith.mulf %197, %220 : vector<16x128xf32>
    %223 = arith.truncf %222 : vector<16x128xf32> to vector<16x128xbf16>
    %cst_86 = arith.constant dense<0.000000e+00> : vector<16x128xf32>
    %224 = tpu.matmul %223, %6, %cst_86 {dimension_numbers = #tpu.dot_dimension_numbers<[1], [0], [0], [1], [0, 0, 1, 1], [], []>} : vector<16x128xbf16>, vector<128x128xbf16>, vector<16x128xf32> -> vector<16x128xf32>
    %225 = arith.addf %221, %224 : vector<16x128xf32>
    %226 = math.tanh %225 : vector<16x128xf32>
    %227 = arith.subf %197, %226 : vector<16x128xf32>
    %228 = arith.mulf %212, %227 : vector<16x128xf32>
    %229 = arith.addf %226, %228 : vector<16x128xf32>
    %c0_87 = arith.constant 0 : index
    %c0_88 = arith.constant 0 : index
    %230 = vector.load %arg9[%c0_87, %c0_88] : memref<16x128xf32, #tpu.memory_space<vmem>>, vector<16x128xf32>
    tpu.vector_store %arg9[%c0_87, %c0_88], %229 {strides = array<i32>} : memref<16x128xf32, #tpu.memory_space<vmem>>, vector<16x128xf32>,
    %231 = arith.truncf %229 : vector<16x128xf32> to vector<16x128xbf16>
    %c5_89 = arith.constant 5 : index
    %c0_90 = arith.constant 0 : index
    %c0_91 = arith.constant 0 : index
    %232 = vector.load %arg8[%c5_89, %c0_90, %c0_91] : memref<8x16x128xbf16, #tpu.memory_space<vmem>>, vector<1x16x128xbf16>
    %233 = vector.shape_cast %232 : vector<1x16x128xbf16> to vector<16x128xbf16>
    %234 = vector.shape_cast %231 : vector<16x128xbf16> to vector<1x16x128xbf16>
    tpu.vector_store %arg8[%c5_89, %c0_90, %c0_91], %234 {strides = array<i32>} : memref<8x16x128xbf16, #tpu.memory_space<vmem>>, vector<1x16x128xbf16>,
    %c0_92 = arith.constant 0 : index
    %c0_93 = arith.constant 0 : index
    %235 = vector.load %arg9[%c0_92, %c0_93] : memref<16x128xf32, #tpu.memory_space<vmem>>, vector<16x128xf32>
    %c6 = arith.constant 6 : index
    %c0_94 = arith.constant 0 : index
    %c0_95 = arith.constant 0 : index
    %236 = vector.load %arg2[%c6, %c0_94, %c0_95] : memref<8x16x4xbf16, #tpu.memory_space<vmem>>, vector<1x16x4xbf16>
    %237 = vector.shape_cast %236 : vector<1x16x4xbf16> to vector<16x4xbf16>
    %cst_96 = arith.constant dense<0.000000e+00> : vector<16x384xf32>
    %238 = tpu.matmul %237, %3, %cst_96 {dimension_numbers = #tpu.dot_dimension_numbers<[1], [0], [0], [1], [0, 0, 1, 1], [], []>} : vector<16x4xbf16>, vector<4x384xbf16>, vector<16x384xf32> -> vector<16x384xf32>
    %239 = vector.broadcast %4 : vector<1x384xf32> to vector<16x384xf32>
    %240 = arith.addf %238, %239 : vector<16x384xf32>
    %241 = arith.truncf %235 : vector<16x128xf32> to vector<16x128xbf16>
    %cst_97 = arith.constant dense<0.000000e+00> : vector<16x256xf32>
    %242 = tpu.matmul %241, %5, %cst_97 {dimension_numbers = #tpu.dot_dimension_numbers<[1], [0], [0], [1], [0, 0, 1, 1], [], []>} : vector<16x128xbf16>, vector<128x256xbf16>, vector<16x256xf32> -> vector<16x256xf32>
    %243 = vector.extract_strided_slice %240 {offsets = [0, 0], sizes = [16, 128], strides = [1, 1]} : vector<16x384xf32> to vector<16x128xf32>
    %244 = vector.extract_strided_slice %242 {offsets = [0, 0], sizes = [16, 128], strides = [1, 1]} : vector<16x256xf32> to vector<16x128xf32>
    %245 = arith.addf %243, %244 : vector<16x128xf32>
    %246 = arith.negf %245 : vector<16x128xf32>
    %247 = math.exp %246 : vector<16x128xf32>
    %cst_98 = arith.constant 1.000000e+00 : f32
    %248 = vector.broadcast %cst_98 : f32 to vector<16x128xf32>
    %249 = arith.addf %248, %247 : vector<16x128xf32>
    %250 = arith.divf %248, %249 : vector<16x128xf32>
    %251 = vector.extract_strided_slice %240 {offsets = [0, 128], sizes = [16, 128], strides = [1, 1]} : vector<16x384xf32> to vector<16x128xf32>
    %252 = vector.extract_strided_slice %242 {offsets = [0, 128], sizes = [16, 128], strides = [1, 1]} : vector<16x256xf32> to vector<16x128xf32>
    %253 = arith.addf %251, %252 : vector<16x128xf32>
    %254 = arith.negf %253 : vector<16x128xf32>
    %255 = math.exp %254 : vector<16x128xf32>
    %cst_99 = arith.constant 1.000000e+00 : f32
    %256 = vector.broadcast %cst_99 : f32 to vector<16x128xf32>
    %257 = arith.addf %256, %255 : vector<16x128xf32>
    %258 = arith.divf %256, %257 : vector<16x128xf32>
    %259 = vector.extract_strided_slice %240 {offsets = [0, 256], sizes = [16, 128], strides = [1, 1]} : vector<16x384xf32> to vector<16x128xf32>
    %260 = arith.mulf %235, %258 : vector<16x128xf32>
    %261 = arith.truncf %260 : vector<16x128xf32> to vector<16x128xbf16>
    %cst_100 = arith.constant dense<0.000000e+00> : vector<16x128xf32>
    %262 = tpu.matmul %261, %6, %cst_100 {dimension_numbers = #tpu.dot_dimension_numbers<[1], [0], [0], [1], [0, 0, 1, 1], [], []>} : vector<16x128xbf16>, vector<128x128xbf16>, vector<16x128xf32> -> vector<16x128xf32>
    %263 = arith.addf %259, %262 : vector<16x128xf32>
    %264 = math.tanh %263 : vector<16x128xf32>
    %265 = arith.subf %235, %264 : vector<16x128xf32>
    %266 = arith.mulf %250, %265 : vector<16x128xf32>
    %267 = arith.addf %264, %266 : vector<16x128xf32>
    %c0_101 = arith.constant 0 : index
    %c0_102 = arith.constant 0 : index
    %268 = vector.load %arg9[%c0_101, %c0_102] : memref<16x128xf32, #tpu.memory_space<vmem>>, vector<16x128xf32>
    tpu.vector_store %arg9[%c0_101, %c0_102], %267 {strides = array<i32>} : memref<16x128xf32, #tpu.memory_space<vmem>>, vector<16x128xf32>,
    %269 = arith.truncf %267 : vector<16x128xf32> to vector<16x128xbf16>
    %c6_103 = arith.constant 6 : index
    %c0_104 = arith.constant 0 : index
    %c0_105 = arith.constant 0 : index
    %270 = vector.load %arg8[%c6_103, %c0_104, %c0_105] : memref<8x16x128xbf16, #tpu.memory_space<vmem>>, vector<1x16x128xbf16>
    %271 = vector.shape_cast %270 : vector<1x16x128xbf16> to vector<16x128xbf16>
    %272 = vector.shape_cast %269 : vector<16x128xbf16> to vector<1x16x128xbf16>
    tpu.vector_store %arg8[%c6_103, %c0_104, %c0_105], %272 {strides = array<i32>} : memref<8x16x128xbf16, #tpu.memory_space<vmem>>, vector<1x16x128xbf16>,
    %c0_106 = arith.constant 0 : index
    %c0_107 = arith.constant 0 : index
    %273 = vector.load %arg9[%c0_106, %c0_107] : memref<16x128xf32, #tpu.memory_space<vmem>>, vector<16x128xf32>
    %c7 = arith.constant 7 : index
    %c0_108 = arith.constant 0 : index
    %c0_109 = arith.constant 0 : index
    %274 = vector.load %arg2[%c7, %c0_108, %c0_109] : memref<8x16x4xbf16, #tpu.memory_space<vmem>>, vector<1x16x4xbf16>
    %275 = vector.shape_cast %274 : vector<1x16x4xbf16> to vector<16x4xbf16>
    %cst_110 = arith.constant dense<0.000000e+00> : vector<16x384xf32>
    %276 = tpu.matmul %275, %3, %cst_110 {dimension_numbers = #tpu.dot_dimension_numbers<[1], [0], [0], [1], [0, 0, 1, 1], [], []>} : vector<16x4xbf16>, vector<4x384xbf16>, vector<16x384xf32> -> vector<16x384xf32>
    %277 = vector.broadcast %4 : vector<1x384xf32> to vector<16x384xf32>
    %278 = arith.addf %276, %277 : vector<16x384xf32>
    %279 = arith.truncf %273 : vector<16x128xf32> to vector<16x128xbf16>
    %cst_111 = arith.constant dense<0.000000e+00> : vector<16x256xf32>
    %280 = tpu.matmul %279, %5, %cst_111 {dimension_numbers = #tpu.dot_dimension_numbers<[1], [0], [0], [1], [0, 0, 1, 1], [], []>} : vector<16x128xbf16>, vector<128x256xbf16>, vector<16x256xf32> -> vector<16x256xf32>
    %281 = vector.extract_strided_slice %278 {offsets = [0, 0], sizes = [16, 128], strides = [1, 1]} : vector<16x384xf32> to vector<16x128xf32>
    %282 = vector.extract_strided_slice %280 {offsets = [0, 0], sizes = [16, 128], strides = [1, 1]} : vector<16x256xf32> to vector<16x128xf32>
    %283 = arith.addf %281, %282 : vector<16x128xf32>
    %284 = arith.negf %283 : vector<16x128xf32>
    %285 = math.exp %284 : vector<16x128xf32>
    %cst_112 = arith.constant 1.000000e+00 : f32
    %286 = vector.broadcast %cst_112 : f32 to vector<16x128xf32>
    %287 = arith.addf %286, %285 : vector<16x128xf32>
    %288 = arith.divf %286, %287 : vector<16x128xf32>
    %289 = vector.extract_strided_slice %278 {offsets = [0, 128], sizes = [16, 128], strides = [1, 1]} : vector<16x384xf32> to vector<16x128xf32>
    %290 = vector.extract_strided_slice %280 {offsets = [0, 128], sizes = [16, 128], strides = [1, 1]} : vector<16x256xf32> to vector<16x128xf32>
    %291 = arith.addf %289, %290 : vector<16x128xf32>
    %292 = arith.negf %291 : vector<16x128xf32>
    %293 = math.exp %292 : vector<16x128xf32>
    %cst_113 = arith.constant 1.000000e+00 : f32
    %294 = vector.broadcast %cst_113 : f32 to vector<16x128xf32>
    %295 = arith.addf %294, %293 : vector<16x128xf32>
    %296 = arith.divf %294, %295 : vector<16x128xf32>
    %297 = vector.extract_strided_slice %278 {offsets = [0, 256], sizes = [16, 128], strides = [1, 1]} : vector<16x384xf32> to vector<16x128xf32>
    %298 = arith.mulf %273, %296 : vector<16x128xf32>
    %299 = arith.truncf %298 : vector<16x128xf32> to vector<16x128xbf16>
    %cst_114 = arith.constant dense<0.000000e+00> : vector<16x128xf32>
    %300 = tpu.matmul %299, %6, %cst_114 {dimension_numbers = #tpu.dot_dimension_numbers<[1], [0], [0], [1], [0, 0, 1, 1], [], []>} : vector<16x128xbf16>, vector<128x128xbf16>, vector<16x128xf32> -> vector<16x128xf32>
    %301 = arith.addf %297, %300 : vector<16x128xf32>
    %302 = math.tanh %301 : vector<16x128xf32>
    %303 = arith.subf %273, %302 : vector<16x128xf32>
    %304 = arith.mulf %288, %303 : vector<16x128xf32>
    %305 = arith.addf %302, %304 : vector<16x128xf32>
    %c0_115 = arith.constant 0 : index
    %c0_116 = arith.constant 0 : index
    %306 = vector.load %arg9[%c0_115, %c0_116] : memref<16x128xf32, #tpu.memory_space<vmem>>, vector<16x128xf32>
    tpu.vector_store %arg9[%c0_115, %c0_116], %305 {strides = array<i32>} : memref<16x128xf32, #tpu.memory_space<vmem>>, vector<16x128xf32>,
    %307 = arith.truncf %305 : vector<16x128xf32> to vector<16x128xbf16>
    %c7_117 = arith.constant 7 : index
    %c0_118 = arith.constant 0 : index
    %c0_119 = arith.constant 0 : index
    %308 = vector.load %arg8[%c7_117, %c0_118, %c0_119] : memref<8x16x128xbf16, #tpu.memory_space<vmem>>, vector<1x16x128xbf16>
    %309 = vector.shape_cast %308 : vector<1x16x128xbf16> to vector<16x128xbf16>
    %310 = vector.shape_cast %307 : vector<16x128xbf16> to vector<1x16x128xbf16>
    tpu.vector_store %arg8[%c7_117, %c0_118, %c0_119], %310 {strides = array<i32>} : memref<8x16x128xbf16, #tpu.memory_space<vmem>>, vector<1x16x128xbf16>,
    return
  }
  func.func @transform_0(%arg0: i32, %arg1: i32) -> (i32, i32, i32) {
    %c0_i32 = arith.constant 0 : i32
    %c0_i32_0 = arith.constant 0 : i32
    return %arg1, %arg0, %c0_i32 : i32, i32, i32
  }
  func.func @transform_1(%arg0: i32, %arg1: i32) -> (i32, i32) {
    %c0_i32 = arith.constant 0 : i32
    %c0_i32_0 = arith.constant 0 : i32
    return %arg0, %c0_i32 : i32, i32
  }
  func.func @transform_2(%arg0: i32, %arg1: i32) -> (i32, i32) {
    %c0_i32 = arith.constant 0 : i32
    %c0_i32_0 = arith.constant 0 : i32
    %c0_i32_1 = arith.constant 0 : i32
    return %c0_i32, %c0_i32_0 : i32, i32
  }
  func.func @transform_3(%arg0: i32, %arg1: i32) -> (i32, i32) {
    %c0_i32 = arith.constant 0 : i32
    %c0_i32_0 = arith.constant 0 : i32
    %c0_i32_1 = arith.constant 0 : i32
    return %c0_i32, %c0_i32_0 : i32, i32
  }
  func.func @transform_4(%arg0: i32, %arg1: i32) -> (i32, i32) {
    %c0_i32 = arith.constant 0 : i32
    %c0_i32_0 = arith.constant 0 : i32
    %c0_i32_1 = arith.constant 0 : i32
    return %c0_i32, %c0_i32_0 : i32, i32
  }
  func.func @transform_5(%arg0: i32, %arg1: i32) -> (i32, i32) {
    %c0_i32 = arith.constant 0 : i32
    %c0_i32_0 = arith.constant 0 : i32
    %c0_i32_1 = arith.constant 0 : i32
    return %c0_i32, %c0_i32_0 : i32, i32
  }
  func.func @transform_6(%arg0: i32, %arg1: i32) -> (i32, i32, i32) {
    %c0_i32 = arith.constant 0 : i32
    %c0_i32_0 = arith.constant 0 : i32
    return %arg1, %arg0, %c0_i32 : i32, i32, i32
  }
}

</mosaic_0001>

<llo_original>
// kernel: tgcn_sequence.2
$region0: #{tgcn_sequence.2}
  #allocation0 [shape = 'u32[]', space=smem, size = 0x4, offset = 0x4, fixed_abs, tag = 'smem constant byte address 0x4 - core index']
  #allocation1 [shape = 'u32[144,128]{1,0:T(1,128)}', space=vmem, size = 0x12000, scoped, tag = 'internal scratch']
  %s0 = inlined_call_operand.vmem [shape: bf16[16,16], index: 0, kind: input, shape index: {}]
  %s1 = inlined_call_operand.vmem [shape: bf16[16,32], index: 1, kind: input, shape index: {}]
  %s2 = inlined_call_operand.vmem [shape: bf16[16,32], index: 2, kind: output, shape index: {}]
  %s3 = sld [smem:[#allocation0]]
  $region18: #{tgcn_sequence.2} parent=0
    _
  %s5 = ssub.s32 1, %s3
  %s6 = scalar_select 0, %s5, %s3
  // Predicated region
  $region2: #{tgcn_sequence.2} parent=0 // pred_check
    _
  $region3: #{tgcn_sequence.2} parent=0 // pred_check_branch
    %8 = sbr.rel (0) target = $region5
  $region4: #{tgcn_sequence.2} parent=0 // pred_region
    _
  $region5: #{tgcn_sequence.2} parent=0 // pred_fallthru
    _
  // Predicated region
  $region6: #{tgcn_sequence.2} parent=0 // pred_check
    _
  $region7: #{tgcn_sequence.2} parent=0 // pred_check_branch
    %10 = sbr.rel (0) target = $region9
  $region8: #{tgcn_sequence.2} parent=0 // pred_region
    _
  $region9: #{tgcn_sequence.2} parent=0 // pred_fallthru
    _
  %v12 = vld [vmem:[%s0] sm:$0xf]
  %v13 = vld [vmem:[%s0 + $0x4] sm:$0xf]
  %v14 = vld [vmem:[%s1] sm:$0xf]
  %v15 = vld [vmem:[%s1 + $0x4] sm:$0xf]
  %v18 = vunpack.c.l.b16 %v12
  %v19 = vunpack.c.l.b16 %v13
  %v20 = vpack.c.b16 %v19, %v18
  %v23 = vunpack.c.l.b16 %v14
  %v24 = vunpack.c.l.b16 %v15
  %v25 = vpack.c.b16 %v24, %v23
  %vm27 = vcmask 130048
  %v29 = vsel %vm27, %v20, 0
  %31 = vmatprep.subr.bf16.mxu0 0
  %32 = vmatpush1.bf16.msra.mxu0 %v25
  %33 = vmatprep.subr.bf16.mxu0 0
  %34 = vmatpush1.bf16.msra.mxu0 0
  %35 = vmatprep.subr.bf16.mxu0 0
  %36 = vmatpush1.bf16.msra.mxu0 0
  %37 = vmatprep.subr.bf16.mxu0 0
  %38 = vmatpush1.bf16.msra.mxu0 0
  %39 = vmatprep.subr.bf16.mxu0 0
  %40 = vmatpush1.bf16.msra.mxu0 0
  %41 = vmatprep.subr.bf16.mxu0 0
  %42 = vmatpush1.bf16.msra.mxu0 0
  %43 = vmatprep.subr.bf16.mxu0 0
  %44 = vmatpush1.bf16.msra.mxu0 0
  %45 = vmatprep.subr.bf16.mxu0 0
  %46 = vmatpush1.bf16.msra.mxu0 0
  %47 = vmatprep.subr.bf16.mxu0 0
  %48 = vmatpush1.bf16.msra.mxu0 0
  %49 = vmatprep.subr.bf16.mxu0 0
  %50 = vmatpush1.bf16.msra.mxu0 0
  %51 = vmatprep.subr.bf16.mxu0 0
  %52 = vmatpush1.bf16.msra.mxu0 0
  %53 = vmatprep.subr.bf16.mxu0 0
  %54 = vmatpush1.bf16.msra.mxu0 0
  %55 = vmatprep.subr.bf16.mxu0 0
  %56 = vmatpush1.bf16.msra.mxu0 0
  %57 = vmatprep.subr.bf16.mxu0 0
  %58 = vmatpush1.bf16.msra.mxu0 0
  %59 = vmatprep.subr.bf16.mxu0 0
  %60 = vmatpush1.bf16.msra.mxu0 0
  %61 = vmatprep.subr.bf16.mxu0 0
  %62 = vmatpush1.bf16.msra.mxu0 0
  %63 = vmatprep.mubr.bf16.mxu0 0
  %64 = vmatmul.mubr.bf16.gmra.mrb[0].mxu0 %v29
  %v65 = vpop.f32.mrb[0].mxu0
  %v66 = vadd.f32 0.0, %v65
  %v67 = vpop.f32.mrb[0].mxu0
  %v68 = vpop.f32.mrb[0].mxu0
  %v69 = vadd.f32 0.0, %v68
  %v70 = vpop.f32.mrb[0].mxu0
  %71 = vdwg.mxu0
  %v72 = vpack.c.bf16 %v69, %v66
  %v74 = vunpack.c.l.b16 %v72
  %v75 = vunpack.c.h.b16 %v72
  %v76 = vpack.c.b16 %v74, %v74
  %v77 = vpack.c.b16 %v75, %v75
  %vm80 = vcmask 257024
  %81 = vst.msk [vmem:[%s2] sm:$0xf] %vm80, %v76
  %82 = vst.msk [vmem:[%s2 + $0x4] sm:$0xf] %vm80, %v77
  // Predicated region
  $region10: #{tgcn_sequence.2} parent=0 // pred_check
    _
  $region11: #{tgcn_sequence.2} parent=0 // pred_check_branch
    %84 = sbr.rel (0) target = $region13
  $region12: #{tgcn_sequence.2} parent=0 // pred_region
    _
  $region13: #{tgcn_sequence.2} parent=0 // pred_fallthru
    _
  // Predicated region
  $region14: #{tgcn_sequence.2} parent=0 // pred_check
    _
  $region15: #{tgcn_sequence.2} parent=0 // pred_check_branch
    %86 = sbr.rel (0) target = $region17
  $region16: #{tgcn_sequence.2} parent=0 // pred_region
    _
  $region17: #{tgcn_sequence.2} parent=0 // pred_fallthru
    _

// kernel: tgcn_sequence.3
$region0: #{tgcn_sequence.3}
  #allocation0 [shape = 'u32[]', space=smem, size = 0x4, offset = 0x4, fixed_abs, tag = 'smem constant byte address 0x4 - core index']
  #allocation1 [shape = 'u32[144,128]{1,0:T(1,128)}', space=vmem, size = 0x12000, scoped, tag = 'internal scratch']
  #allocation2 [shape = 'f32[16,128]{1,0:T(8,128)}', space=vmem, size = 0x2000, scoped, tag = 'scratch operand']
  %s0 = inlined_call_operand.vmem [shape: bf16[8,16,4], index: 0, kind: input, shape index: {}]
  %s1 = inlined_call_operand.vmem [shape: f32[16,128], index: 1, kind: input, shape index: {}]
  %s2 = inlined_call_operand.vmem [shape: bf16[4,384], index: 2, kind: input, shape index: {}]
  %s3 = inlined_call_operand.vmem [shape: f32[1,384], index: 3, kind: input, shape index: {}]
  %s4 = inlined_call_operand.vmem [shape: bf16[128,256], index: 4, kind: input, shape index: {}]
  %s5 = inlined_call_operand.vmem [shape: bf16[128,128], index: 5, kind: input, shape index: {}]
  %s6 = inlined_call_operand.vmem [shape: bf16[8,16,128], index: 6, kind: output, shape index: {}]
  %s7 = sld [smem:[#allocation0]]
  $region38: #{tgcn_sequence.3} parent=0
    _
  %s9 = ssub.s32 1, %s7
  %s10 = scalar_select 0, %s9, %s7
  // Predicated region
  $region2: #{tgcn_sequence.3} parent=0 // pred_check
    _
  $region3: #{tgcn_sequence.3} parent=0 // pred_check_branch
    %12 = sbr.rel (0) target = $region5
  $region4: #{tgcn_sequence.3} parent=0 // pred_region
    _
  $region5: #{tgcn_sequence.3} parent=0 // pred_fallthru
    _
  // Predicated region
  $region6: #{tgcn_sequence.3} parent=0 // pred_check
    _
  $region7: #{tgcn_sequence.3} parent=0 // pred_check_branch
    %14 = sbr.rel (0) target = $region9
  $region8: #{tgcn_sequence.3} parent=0 // pred_region
    _
  $region9: #{tgcn_sequence.3} parent=0 // pred_fallthru
    _
  // Predicated region
  $region10: #{tgcn_sequence.3} parent=0 // pred_check
    _
  $region11: #{tgcn_sequence.3} parent=0 // pred_check_branch
    %16 = sbr.rel (0) target = $region13
  $region12: #{tgcn_sequence.3} parent=0 // pred_region
    _
  $region13: #{tgcn_sequence.3} parent=0 // pred_fallthru
    _
  // Predicated region
  $region14: #{tgcn_sequence.3} parent=0 // pred_check
    _
  $region15: #{tgcn_sequence.3} parent=0 // pred_check_branch
    %18 = sbr.rel (0) target = $region17
  $region16: #{tgcn_sequence.3} parent=0 // pred_region
    _
  $region17: #{tgcn_sequence.3} parent=0 // pred_fallthru
    _
  // Predicated region
  $region18: #{tgcn_sequence.3} parent=0 // pred_check
    _
  $region19: #{tgcn_sequence.3} parent=0 // pred_check_branch
    %20 = sbr.rel (0) target = $region21
  $region20: #{tgcn_sequence.3} parent=0 // pred_region
    _
  $region21: #{tgcn_sequence.3} parent=0 // pred_fallthru
    _
  // Predicated region
  $region22: #{tgcn_sequence.3} parent=0 // pred_check
    _
  $region23: #{tgcn_sequence.3} parent=0 // pred_check_branch
    %22 = sbr.rel (0) target = $region25
  $region24: #{tgcn_sequence.3} parent=0 // pred_region
    _
  $region25: #{tgcn_sequence.3} parent=0 // pred_fallthru
    _
  %p24 = scmp.eq.s32.totalorder 0, 0
  // Predicated region
  $region26: #{tgcn_sequence.3} parent=0 // pred_check
    %p25 = pneg %p24
  $region27: #{tgcn_sequence.3} parent=0 // pred_check_branch
    %27 = sbr.rel (%p25) target = $region29
  $region28: #{tgcn_sequence.3} parent=0 // pred_region
    %v28 = vld [vmem:[%s1] sm:$0xff]
    %v29 = vld [vmem:[%s1 + $0x8] sm:$0xff]
    %30 = vst [vmem:[#allocation2] sm:$0xff] %v28
    %31 = vst [vmem:[#allocation2 + $0x8] sm:$0xff] %v29
  $region29: #{tgcn_sequence.3} parent=0 // pred_fallthru
    _
  %v32 = vld [vmem:[%s2] sm:$0x3f]
  %v33 = vld [vmem:[%s3] sm:$0x7]
  %v34 = vld [vmem:[%s4] sm:$0xff]
  %v35 = vld [vmem:[%s4 + $0x8] sm:$0xff]
  %v36 = vld [vmem:[%s4 + $0x10] sm:$0xff]
  %v37 = vld [vmem:[%s4 + $0x18] sm:$0xff]
  %v38 = vld [vmem:[%s4 + $0x20] sm:$0xff]
  %v39 = vld [vmem:[%s4 + $0x28] sm:$0xff]
  %v40 = vld [vmem:[%s4 + $0x30] sm:$0xff]
  %v41 = vld [vmem:[%s4 + $0x38] sm:$0xff]
  %v42 = vld [vmem:[%s4 + $0x40] sm:$0xff]
  %v43 = vld [vmem:[%s4 + $0x48] sm:$0xff]
  %v44 = vld [vmem:[%s4 + $0x50] sm:$0xff]
  %v45 = vld [vmem:[%s4 + $0x58] sm:$0xff]
  %v46 = vld [vmem:[%s4 + $0x60] sm:$0xff]
  %v47 = vld [vmem:[%s4 + $0x68] sm:$0xff]
  %v48 = vld [vmem:[%s4 + $0x70] sm:$0xff]
  %v49 = vld [vmem:[%s4 + $0x78] sm:$0xff]
  %v50 = vld [vmem:[%s5] sm:$0xf]
  %v51 = vld [vmem:[%s5 + $0x4] sm:$0xf]
  %v52 = vld [vmem:[%s5 + $0x8] sm:$0xf]
  %v53 = vld [vmem:[%s5 + $0xc] sm:$0xf]
  %v54 = vld [vmem:[%s5 + $0x10] sm:$0xf]
  %v55 = vld [vmem:[%s5 + $0x14] sm:$0xf]
  %v56 = vld [vmem:[%s5 + $0x18] sm:$0xf]
  %v57 = vld [vmem:[%s5 + $0x1c] sm:$0xf]
  %v58 = vld [vmem:[%s5 + $0x20] sm:$0xf]
  %v59 = vld [vmem:[%s5 + $0x24] sm:$0xf]
  %v60 = vld [vmem:[%s5 + $0x28] sm:$0xf]
  %v61 = vld [vmem:[%s5 + $0x2c] sm:$0xf]
  %v62 = vld [vmem:[%s5 + $0x30] sm:$0xf]
  %v63 = vld [vmem:[%s5 + $0x34] sm:$0xf]
  %v64 = vld [vmem:[%s5 + $0x38] sm:$0xf]
  %v65 = vld [vmem:[%s5 + $0x3c] sm:$0xf]
  %v66 = vld [vmem:[#allocation2] sm:$0xff]
  %v67 = vld [vmem:[#allocation2 + $0x8] sm:$0xff]
  %v68 = vld [vmem:[%s0] sm:$0xf]
  %v69 = vld [vmem:[%s0 + $0x4] sm:$0xf]
  %v71 = vlaneseq
  %v72 = vshrl.u32 %v71, 7
  %v73 = vsub.s32 0, %v72
  %v74 = vrot.slane %v33, %v73
  %v75 = vlaneseq
  %v76 = vshrl.u32 %v75, 7
  %v77 = vsub.s32 1, %v76
  %v78 = vrot.slane %v33, %v77
  %v79 = vlaneseq
  %v80 = vshrl.u32 %v79, 7
  %v81 = vsub.s32 2, %v80
  %v82 = vrot.slane %v33, %v81
  %v88 = vunpack.c.l.b16 %v68
  %v89 = vunpack.c.l.b16 %v69
  %v90 = vpack.c.b16 %v89, %v88
  %v92 = vcombine.high %v32, %v32
  %v94 = vunpack.c.l.s4 1983009808
  %v95 = vunpack.c.0.s8 %v94
  %v96 = vlaneseq
  %v97 = vshrl.u32 %v96, 7
  %v98 = vsub.s32 %v95, %v97
  %v99 = vrot.slane %v32, %v98
  %v101 = vunpack.c.l.s4 1983009808
  %v102 = vunpack.c.0.s8 %v101
  %v103 = vlaneseq
  %v104 = vshrl.u32 %v103, 7
  %v105 = vsub.s32 %v102, %v104
  %v106 = vrot.slane %v92, %v105
  %v107 = vcombine.high %v99, %v99
  %vm108 = vcmask 31744
  %v110 = vsel %vm108, %v90, 0
  %vm112 = vcmask 1041408
  %v114 = vsel %vm112, %v99, 0
  %v117 = vsel %vm112, %v107, 0
  %v120 = vsel %vm112, %v106, 0
  %122 = vmatprep.subr.bf16.mxu0 %v117
  %123 = vmatpush1.bf16.msra.mxu0 %v114
  %124 = vmatprep.subr.bf16.mxu0 0
  %125 = vmatpush1.bf16.msra.mxu0 0
  %126 = vmatprep.subr.bf16.mxu0 0
  %127 = vmatpush1.bf16.msra.mxu0 0
  %128 = vmatprep.subr.bf16.mxu0 0
  %129 = vmatpush1.bf16.msra.mxu0 0
  %130 = vmatprep.subr.bf16.mxu0 0
  %131 = vmatpush1.bf16.msra.mxu0 0
  %132 = vmatprep.subr.bf16.mxu0 0
  %133 = vmatpush1.bf16.msra.mxu0 0
  %134 = vmatprep.subr.bf16.mxu0 0
  %135 = vmatpush1.bf16.msra.mxu0 0
  %136 = vmatprep.subr.bf16.mxu0 0
  %137 = vmatpush1.bf16.msra.mxu0 0
  %138 = vmatprep.subr.bf16.mxu0 0
  %139 = vmatpush1.bf16.msra.mxu0 0
  %140 = vmatprep.subr.bf16.mxu0 0
  %141 = vmatpush1.bf16.msra.mxu0 0
  %142 = vmatprep.subr.bf16.mxu0 0
  %143 = vmatpush1.bf16.msra.mxu0 0
  %144 = vmatprep.subr.bf16.mxu0 0
  %145 = vmatpush1.bf16.msra.mxu0 0
  %146 = vmatprep.subr.bf16.mxu0 0
  %147 = vmatpush1.bf16.msra.mxu0 0
  %148 = vmatprep.subr.bf16.mxu0 0
  %149 = vmatpush1.bf16.msra.mxu0 0
  %150 = vmatprep.subr.bf16.mxu0 0
  %151 = vmatpush1.bf16.msra.mxu0 0
  %152 = vmatprep.subr.bf16.mxu0 0
  %153 = vmatpush1.bf16.msra.mxu0 0
  %154 = vmatprep.mubr.bf16.mxu0 0
  %155 = vmatmul.mubr.bf16.gmra.mrb[0].mxu0 %v110
  %v156 = vpop.f32.mrb[0].mxu0
  %v157 = vadd.f32 %v74, %v156
  %v158 = vpop.f32.mrb[0].mxu0
  %v159 = vadd.f32 %v78, %v158
  %v160 = vpop.f32.mrb[0].mxu0
  %v161 = vadd.f32 %v74, %v160
  %v162 = vpop.f32.mrb[0].mxu0
  %v163 = vadd.f32 %v78, %v162
  %164 = vdwg.mxu0
  %165 = vmatprep.subr.bf16.mxu0 0
  %166 = vmatpush1.bf16.msra.mxu0 %v120
  %167 = vmatprep.subr.bf16.mxu0 0
  %168 = vmatpush1.bf16.msra.mxu0 0
  %169 = vmatprep.subr.bf16.mxu0 0
  %170 = vmatpush1.bf16.msra.mxu0 0
  %171 = vmatprep.subr.bf16.mxu0 0
  %172 = vmatpush1.bf16.msra.mxu0 0
  %173 = vmatprep.subr.bf16.mxu0 0
  %174 = vmatpush1.bf16.msra.mxu0 0
  %175 = vmatprep.subr.bf16.mxu0 0
  %176 = vmatpush1.bf16.msra.mxu0 0
  %177 = vmatprep.subr.bf16.mxu0 0
  %178 = vmatpush1.bf16.msra.mxu0 0
  %179 = vmatprep.subr.bf16.mxu0 0
  %180 = vmatpush1.bf16.msra.mxu0 0
  %181 = vmatprep.subr.bf16.mxu0 0
  %182 = vmatpush1.bf16.msra.mxu0 0
  %183 = vmatprep.subr.bf16.mxu0 0
  %184 = vmatpush1.bf16.msra.mxu0 0
  %185 = vmatprep.subr.bf16.mxu0 0
  %186 = vmatpush1.bf16.msra.mxu0 0
  %187 = vmatprep.subr.bf16.mxu0 0
  %188 = vmatpush1.bf16.msra.mxu0 0
  %189 = vmatprep.subr.bf16.mxu0 0
  %190 = vmatpush1.bf16.msra.mxu0 0
  %191 = vmatprep.subr.bf16.mxu0 0
  %192 = vmatpush1.bf16.msra.mxu0 0
  %193 = vmatprep.subr.bf16.mxu0 0
  %194 = vmatpush1.bf16.msra.mxu0 0
  %195 = vmatprep.subr.bf16.mxu0 0
  %196 = vmatpush1.bf16.msra.mxu0 0
  %197 = vmatprep.mubr.bf16.mxu0 0
  %198 = vmatmul.mubr.bf16.gmra.mrb[0].mxu0 %v110
  %v199 = vpop.f32.mrb[0].mxu0
  %v200 = vadd.f32 %v82, %v199
  %v201 = vpop.f32.mrb[0].mxu0
  %v202 = vpop.f32.mrb[0].mxu0
  %v203 = vadd.f32 %v82, %v202
  %v204 = vpop.f32.mrb[0].mxu0
  %205 = vdwg.mxu0
  %v206 = vpack.c.bf16 %v67, %v66
  %v223 = vunpack.c.l.b16 %v34
  %v224 = vunpack.c.h.b16 %v34
  %v225 = vunpack.c.l.b16 %v35
  %v226 = vunpack.c.h.b16 %v35
  %v227 = vunpack.c.l.b16 %v36
  %v228 = vunpack.c.h.b16 %v36
  %v229 = vunpack.c.l.b16 %v37
  %v230 = vunpack.c.h.b16 %v37
  %v231 = vunpack.c.l.b16 %v38
  %v232 = vunpack.c.h.b16 %v38
  %v233 = vunpack.c.l.b16 %v39
  %v234 = vunpack.c.h.b16 %v39
  %v235 = vunpack.c.l.b16 %v40
  %v236 = vunpack.c.h.b16 %v40
  %v237 = vunpack.c.l.b16 %v41
  %v238 = vunpack.c.h.b16 %v41
  %v239 = vunpack.c.l.b16 %v42
  %v240 = vunpack.c.h.b16 %v42
  %v241 = vunpack.c.l.b16 %v43
  %v242 = vunpack.c.h.b16 %v43
  %v243 = vunpack.c.l.b16 %v44
  %v244 = vunpack.c.h.b16 %v44
  %v245 = vunpack.c.l.b16 %v45
  %v246 = vunpack.c.h.b16 %v45
  %v247 = vunpack.c.l.b16 %v46
  %v248 = vunpack.c.h.b16 %v46
  %v249 = vunpack.c.l.b16 %v47
  %v250 = vunpack.c.h.b16 %v47
  %v251 = vunpack.c.l.b16 %v48
  %v252 = vunpack.c.h.b16 %v48
  %v253 = vunpack.c.l.b16 %v49
  %v254 = vunpack.c.h.b16 %v49
  %v255 = vpack.c.b16 %v225, %v223
  %v256 = vpack.c.b16 %v226, %v224
  %v257 = vpack.c.b16 %v229, %v227
  %v258 = vpack.c.b16 %v230, %v228
  %v259 = vpack.c.b16 %v233, %v231
  %v260 = vpack.c.b16 %v234, %v232
  %v261 = vpack.c.b16 %v237, %v235
  %v262 = vpack.c.b16 %v238, %v236
  %v263 = vpack.c.b16 %v241, %v239
  %v264 = vpack.c.b16 %v242, %v240
  %v265 = vpack.c.b16 %v245, %v243
  %v266 = vpack.c.b16 %v246, %v244
  %v267 = vpack.c.b16 %v249, %v247
  %v268 = vpack.c.b16 %v250, %v248
  %v269 = vpack.c.b16 %v253, %v251
  %v270 = vpack.c.b16 %v254, %v252
  %287 = vmatprep.subr.bf16.mxu0 %v256
  %288 = vmatpush1.bf16.msra.mxu0 %v255
  %289 = vmatprep.subr.bf16.mxu0 %v258
  %290 = vmatpush1.bf16.msra.mxu0 %v257
  %291 = vmatprep.subr.bf16.mxu0 %v260
  %292 = vmatpush1.bf16.msra.mxu0 %v259
  %293 = vmatprep.subr.bf16.mxu0 %v262
  %294 = vmatpush1.bf16.msra.mxu0 %v261
  %295 = vmatprep.subr.bf16.mxu0 %v264
  %296 = vmatpush1.bf16.msra.mxu0 %v263
  %297 = vmatprep.subr.bf16.mxu0 %v266
  %298 = vmatpush1.bf16.msra.mxu0 %v265
  %299 = vmatprep.subr.bf16.mxu0 %v268
  %300 = vmatpush1.bf16.msra.mxu0 %v267
  %301 = vmatprep.subr.bf16.mxu0 %v270
  %302 = vmatpush1.bf16.msra.mxu0 %v269
  %303 = vmatprep.subr.bf16.mxu0 0
  %304 = vmatpush1.bf16.msra.mxu0 0
  %305 = vmatprep.subr.bf16.mxu0 0
  %306 = vmatpush1.bf16.msra.mxu0 0
  %307 = vmatprep.subr.bf16.mxu0 0
  %308 = vmatpush1.bf16.msra.mxu0 0
  %309 = vmatprep.subr.bf16.mxu0 0
  %310 = vmatpush1.bf16.msra.mxu0 0
  %311 = vmatprep.subr.bf16.mxu0 0
  %312 = vmatpush1.bf16.msra.mxu0 0
  %313 = vmatprep.subr.bf16.mxu0 0
  %314 = vmatpush1.bf16.msra.mxu0 0
  %315 = vmatprep.subr.bf16.mxu0 0
  %316 = vmatpush1.bf16.msra.mxu0 0
  %317 = vmatprep.subr.bf16.mxu0 0
  %318 = vmatpush1.bf16.msra.mxu0 0
  %319 = vmatprep.mubr.bf16.mxu0 0
  %320 = vmatmul.mubr.bf16.gmra.mrb[0].mxu0 %v206
  %v321 = vpop.f32.mrb[0].mxu0
  %v322 = vadd.f32 0.0, %v321
  %v323 = vpop.f32.mrb[0].mxu0
  %v324 = vadd.f32 0.0, %v323
  %v325 = vpop.f32.mrb[0].mxu0
  %v326 = vadd.f32 0.0, %v325
  %v327 = vpop.f32.mrb[0].mxu0
  %v328 = vadd.f32 0.0, %v327
  %329 = vdwg.mxu0
  %v330 = vadd.f32 %v157, %v322
  %v331 = vadd.f32 %v161, %v326
  %v332 = vxor.u32 %v330, 2147483648
  %v333 = vxor.u32 %v331, 2147483648
  %v334 = vmul.f32 %v332, 1.442695
  %v335 = vpow.pop %v334
  %v336 = vmul.f32 %v333, 1.442695
  %v337 = vpow.pop %v336
  %v338 = vadd.f32 %v335, 1.0
  %v339 = vadd.f32 %v337, 1.0
  %v340 = vrcp.pop %v338
  %v341 = vmul.f32 1.0, %v340
  %v342 = vrcp.pop %v339
  %v343 = vmul.f32 1.0, %v342
  %v344 = vadd.f32 %v159, %v324
  %v345 = vadd.f32 %v163, %v328
  %v346 = vxor.u32 %v344, 2147483648
  %v347 = vxor.u32 %v345, 2147483648
  %v348 = vmul.f32 %v346, 1.442695
  %v349 = vpow.pop %v348
  %v350 = vmul.f32 %v347, 1.442695
  %v351 = vpow.pop %v350
  %v352 = vadd.f32 %v349, 1.0
  %v353 = vadd.f32 %v351, 1.0
  %v354 = vrcp.pop %v352
  %v355 = vmul.f32 1.0, %v354
  %v356 = vrcp.pop %v353
  %v357 = vmul.f32 1.0, %v356
  %v358 = vmul.f32 %v66, %v355
  %v359 = vmul.f32 %v67, %v357
  %v360 = vpack.c.bf16 %v359, %v358
  %v377 = vunpack.c.l.b16 %v50
  %v378 = vunpack.c.l.b16 %v51
  %v379 = vunpack.c.l.b16 %v52
  %v380 = vunpack.c.l.b16 %v53
  %v381 = vunpack.c.l.b16 %v54
  %v382 = vunpack.c.l.b16 %v55
  %v383 = vunpack.c.l.b16 %v56
  %v384 = vunpack.c.l.b16 %v57
  %v385 = vunpack.c.l.b16 %v58
  %v386 = vunpack.c.l.b16 %v59
  %v387 = vunpack.c.l.b16 %v60
  %v388 = vunpack.c.l.b16 %v61
  %v389 = vunpack.c.l.b16 %v62
  %v390 = vunpack.c.l.b16 %v63
  %v391 = vunpack.c.l.b16 %v64
  %v392 = vunpack.c.l.b16 %v65
  %v393 = vpack.c.b16 %v378, %v377
  %v394 = vpack.c.b16 %v380, %v379
  %v395 = vpack.c.b16 %v382, %v381
  %v396 = vpack.c.b16 %v384, %v383
  %v397 = vpack.c.b16 %v386, %v385
  %v398 = vpack.c.b16 %v388, %v387
  %v399 = vpack.c.b16 %v390, %v389
  %v400 = vpack.c.b16 %v392, %v391
  %409 = vmatprep.subr.bf16.mxu0 0
  %410 = vmatpush1.bf16.msra.mxu0 %v393
  %411 = vmatprep.subr.bf16.mxu0 0
  %412 = vmatpush1.bf16.msra.mxu0 %v394
  %413 = vmatprep.subr.bf16.mxu0 0
  %414 = vmatpush1.bf16.msra.mxu0 %v395
  %415 = vmatprep.subr.bf16.mxu0 0
  %416 = vmatpush1.bf16.msra.mxu0 %v396
  %417 = vmatprep.subr.bf16.mxu0 0
  %418 = vmatpush1.bf16.msra.mxu0 %v397
  %419 = vmatprep.subr.bf16.mxu0 0
  %420 = vmatpush1.bf16.msra.mxu0 %v398
  %421 = vmatprep.subr.bf16.mxu0 0
  %422 = vmatpush1.bf16.msra.mxu0 %v399
  %423 = vmatprep.subr.bf16.mxu0 0
  %424 = vmatpush1.bf16.msra.mxu0 %v400
  %425 = vmatprep.subr.bf16.mxu0 0
  %426 = vmatpush1.bf16.msra.mxu0 0
  %427 = vmatprep.subr.bf16.mxu0 0
  %428 = vmatpush1.bf16.msra.mxu0 0
  %429 = vmatprep.subr.bf16.mxu0 0
  %430 = vmatpush1.bf16.msra.mxu0 0
  %431 = vmatprep.subr.bf16.mxu0 0
  %432 = vmatpush1.bf16.msra.mxu0 0
  %433 = vmatprep.subr.bf16.mxu0 0
  %434 = vmatpush1.bf16.msra.mxu0 0
  %435 = vmatprep.subr.bf16.mxu0 0
  %436 = vmatpush1.bf16.msra.mxu0 0
  %437 = vmatprep.subr.bf16.mxu0 0
  %438 = vmatpush1.bf16.msra.mxu0 0
  %439 = vmatprep.subr.bf16.mxu0 0
  %440 = vmatpush1.bf16.msra.mxu0 0
  %441 = vmatprep.mubr.bf16.mxu0 0
  %442 = vmatmul.mubr.bf16.gmra.mrb[0].mxu0 %v360
  %v443 = vpop.f32.mrb[0].mxu0
  %v444 = vadd.f32 0.0, %v443
  %v445 = vpop.f32.mrb[0].mxu0
  %v446 = vpop.f32.mrb[0].mxu0
  %v447 = vadd.f32 0.0, %v446
  %v448 = vpop.f32.mrb[0].mxu0
  %449 = vdwg.mxu0
  %v450 = vadd.f32 %v200, %v444
  %v451 = vadd.f32 %v203, %v447
  %v452 = vtanh.pop %v450
  %v453 = vtanh.pop %v451
  %v454 = vsub.f32 %v66, %v452
  %v455 = vsub.f32 %v67, %v453
  %v456 = vmul.f32 %v341, %v454
  %v457 = vmul.f32 %v343, %v455
  %v458 = vadd.f32 %v452, %v456
  %v459 = vadd.f32 %v453, %v457
  %460 = vst [vmem:[#allocation2] sm:$0xff] %v458
  %461 = vst [vmem:[#allocation2 + $0x8] sm:$0xff] %v459
  %v462 = vpack.c.bf16 %v459, %v458
  %v464 = vunpack.c.l.b16 %v462
  %v465 = vunpack.c.h.b16 %v462
  %v466 = vpack.c.b16 %v464, %v464
  %v467 = vpack.c.b16 %v465, %v465
  %470 = vst [vmem:[%s6] sm:$0xf] %v466
  %471 = vst [vmem:[%s6 + $0x4] sm:$0xf] %v467
  %v472 = vld [vmem:[#allocation2] sm:$0xff]
  %v473 = vld [vmem:[#allocation2 + $0x8] sm:$0xff]
  %s474 = scalar_lea.vmem %s0, 8
  %v475 = vld [vmem:[%s474] sm:$0xf]
  %v476 = vld [vmem:[%s474 + $0x4] sm:$0xf]
  %v479 = vunpack.c.l.b16 %v475
  %v480 = vunpack.c.l.b16 %v476
  %v481 = vpack.c.b16 %v480, %v479
  %v483 = vsel %vm108, %v481, 0
  %485 = vmatprep.subr.bf16.mxu0 %v117
  %486 = vmatpush1.bf16.msra.mxu0 %v114
  %487 = vmatprep.subr.bf16.mxu0 0
  %488 = vmatpush1.bf16.msra.mxu0 0
  %489 = vmatprep.subr.bf16.mxu0 0
  %490 = vmatpush1.bf16.msra.mxu0 0
  %491 = vmatprep.subr.bf16.mxu0 0
  %492 = vmatpush1.bf16.msra.mxu0 0
  %493 = vmatprep.subr.bf16.mxu0 0
  %494 = vmatpush1.bf16.msra.mxu0 0
  %495 = vmatprep.subr.bf16.mxu0 0
  %496 = vmatpush1.bf16.msra.mxu0 0
  %497 = vmatprep.subr.bf16.mxu0 0
  %498 = vmatpush1.bf16.msra.mxu0 0
  %499 = vmatprep.subr.bf16.mxu0 0
  %500 = vmatpush1.bf16.msra.mxu0 0
  %501 = vmatprep.subr.bf16.mxu0 0
  %502 = vmatpush1.bf16.msra.mxu0 0
  %503 = vmatprep.subr.bf16.mxu0 0
  %504 = vmatpush1.bf16.msra.mxu0 0
  %505 = vmatprep.subr.bf16.mxu0 0
  %506 = vmatpush1.bf16.msra.mxu0 0
  %507 = vmatprep.subr.bf16.mxu0 0
  %508 = vmatpush1.bf16.msra.mxu0 0
  %509 = vmatprep.subr.bf16.mxu0 0
  %510 = vmatpush1.bf16.msra.mxu0 0
  %511 = vmatprep.subr.bf16.mxu0 0
  %512 = vmatpush1.bf16.msra.mxu0 0
  %513 = vmatprep.subr.bf16.mxu0 0
  %514 = vmatpush1.bf16.msra.mxu0 0
  %515 = vmatprep.subr.bf16.mxu0 0
  %516 = vmatpush1.bf16.msra.mxu0 0
  %517 = vmatprep.mubr.bf16.mxu0 0
  %518 = vmatmul.mubr.bf16.gmra.mrb[0].mxu0 %v483
  %v519 = vpop.f32.mrb[0].mxu0
  %v520 = vadd.f32 %v74, %v519
  %v521 = vpop.f32.mrb[0].mxu0
  %v522 = vadd.f32 %v78, %v521
  %v523 = vpop.f32.mrb[0].mxu0
  %v524 = vadd.f32 %v74, %v523
  %v525 = vpop.f32.mrb[0].mxu0
  %v526 = vadd.f32 %v78, %v525
  %527 = vdwg.mxu0
  %528 = vmatprep.subr.bf16.mxu0 0
  %529 = vmatpush1.bf16.msra.mxu0 %v120
  %530 = vmatprep.subr.bf16.mxu0 0
  %531 = vmatpush1.bf16.msra.mxu0 0
  %532 = vmatprep.subr.bf16.mxu0 0
  %533 = vmatpush1.bf16.msra.mxu0 0
  %534 = vmatprep.subr.bf16.mxu0 0
  %535 = vmatpush1.bf16.msra.mxu0 0
  %536 = vmatprep.subr.bf16.mxu0 0
  %537 = vmatpush1.bf16.msra.mxu0 0
  %538 = vmatprep.subr.bf16.mxu0 0
  %539 = vmatpush1.bf16.msra.mxu0 0
  %540 = vmatprep.subr.bf16.mxu0 0
  %541 = vmatpush1.bf16.msra.mxu0 0
  %542 = vmatprep.subr.bf16.mxu0 0
  %543 = vmatpush1.bf16.msra.mxu0 0
  %544 = vmatprep.subr.bf16.mxu0 0
  %545 = vmatpush1.bf16.msra.mxu0 0
  %546 = vmatprep.subr.bf16.mxu0 0
  %547 = vmatpush1.bf16.msra.mxu0 0
  %548 = vmatprep.subr.bf16.mxu0 0
  %549 = vmatpush1.bf16.msra.mxu0 0
  %550 = vmatprep.subr.bf16.mxu0 0
  %551 = vmatpush1.bf16.msra.mxu0 0
  %552 = vmatprep.subr.bf16.mxu0 0
  %553 = vmatpush1.bf16.msra.mxu0 0
  %554 = vmatprep.subr.bf16.mxu0 0
  %555 = vmatpush1.bf16.msra.mxu0 0
  %556 = vmatprep.subr.bf16.mxu0 0
  %557 = vmatpush1.bf16.msra.mxu0 0
  %558 = vmatprep.subr.bf16.mxu0 0
  %559 = vmatpush1.bf16.msra.mxu0 0
  %560 = vmatprep.mubr.bf16.mxu0 0
  %561 = vmatmul.mubr.bf16.gmra.mrb[0].mxu0 %v483
  %v562 = vpop.f32.mrb[0].mxu0
  %v563 = vadd.f32 %v82, %v562
  %v564 = vpop.f32.mrb[0].mxu0
  %v565 = vpop.f32.mrb[0].mxu0
  %v566 = vadd.f32 %v82, %v565
  %v567 = vpop.f32.mrb[0].mxu0
  %568 = vdwg.mxu0
  %v569 = vpack.c.bf16 %v473, %v472
  %570 = vmatprep.subr.bf16.mxu0 %v256
  %571 = vmatpush1.bf16.msra.mxu0 %v255
  %572 = vmatprep.subr.bf16.mxu0 %v258
  %573 = vmatpush1.bf16.msra.mxu0 %v257
  %574 = vmatprep.subr.bf16.mxu0 %v260
  %575 = vmatpush1.bf16.msra.mxu0 %v259
  %576 = vmatprep.subr.bf16.mxu0 %v262
  %577 = vmatpush1.bf16.msra.mxu0 %v261
  %578 = vmatprep.subr.bf16.mxu0 %v264
  %579 = vmatpush1.bf16.msra.mxu0 %v263
  %580 = vmatprep.subr.bf16.mxu0 %v266
  %581 = vmatpush1.bf16.msra.mxu0 %v265
  %582 = vmatprep.subr.bf16.mxu0 %v268
  %583 = vmatpush1.bf16.msra.mxu0 %v267
  %584 = vmatprep.subr.bf16.mxu0 %v270
  %585 = vmatpush1.bf16.msra.mxu0 %v269
  %586 = vmatprep.subr.bf16.mxu0 0
  %587 = vmatpush1.bf16.msra.mxu0 0
  %588 = vmatprep.subr.bf16.mxu0 0
  %589 = vmatpush1.bf16.msra.mxu0 0
  %590 = vmatprep.subr.bf16.mxu0 0
  %591 = vmatpush1.bf16.msra.mxu0 0
  %592 = vmatprep.subr.bf16.mxu0 0
  %593 = vmatpush1.bf16.msra.mxu0 0
  %594 = vmatprep.subr.bf16.mxu0 0
  %595 = vmatpush1.bf16.msra.mxu0 0
  %596 = vmatprep.subr.bf16.mxu0 0
  %597 = vmatpush1.bf16.msra.mxu0 0
  %598 = vmatprep.subr.bf16.mxu0 0
  %599 = vmatpush1.bf16.msra.mxu0 0
  %600 = vmatprep.subr.bf16.mxu0 0
  %601 = vmatpush1.bf16.msra.mxu0 0
  %602 = vmatprep.mubr.bf16.mxu0 0
  %603 = vmatmul.mubr.bf16.gmra.mrb[0].mxu0 %v569
  %v604 = vpop.f32.mrb[0].mxu0
  %v605 = vadd.f32 0.0, %v604
  %v606 = vpop.f32.mrb[0].mxu0
  %v607 = vadd.f32 0.0, %v606
  %v608 = vpop.f32.mrb[0].mxu0
  %v609 = vadd.f32 0.0, %v608
  %v610 = vpop.f32.mrb[0].mxu0
  %v611 = vadd.f32 0.0, %v610
  %612 = vdwg.mxu0
  %v613 = vadd.f32 %v520, %v605
  %v614 = vadd.f32 %v524, %v609
  %v615 = vxor.u32 %v613, 2147483648
  %v616 = vxor.u32 %v614, 2147483648
  %v617 = vmul.f32 %v615, 1.442695
  %v618 = vpow.pop %v617
  %v619 = vmul.f32 %v616, 1.442695
  %v620 = vpow.pop %v619
  %v621 = vadd.f32 %v618, 1.0
  %v622 = vadd.f32 %v620, 1.0
  %v623 = vrcp.pop %v621
  %v624 = vmul.f32 1.0, %v623
  %v625 = vrcp.pop %v622
  %v626 = vmul.f32 1.0, %v625
  %v627 = vadd.f32 %v522, %v607
  %v628 = vadd.f32 %v526, %v611
  %v629 = vxor.u32 %v627, 2147483648
  %v630 = vxor.u32 %v628, 2147483648
  %v631 = vmul.f32 %v629, 1.442695
  %v632 = vpow.pop %v631
  %v633 = vmul.f32 %v630, 1.442695
  %v634 = vpow.pop %v633
  %v635 = vadd.f32 %v632, 1.0
  %v636 = vadd.f32 %v634, 1.0
  %v637 = vrcp.pop %v635
  %v638 = vmul.f32 1.0, %v637
  %v639 = vrcp.pop %v636
  %v640 = vmul.f32 1.0, %v639
  %v641 = vmul.f32 %v472, %v638
  %v642 = vmul.f32 %v473, %v640
  %v643 = vpack.c.bf16 %v642, %v641
  %644 = vmatprep.subr.bf16.mxu0 0
  %645 = vmatpush1.bf16.msra.mxu0 %v393
  %646 = vmatprep.subr.bf16.mxu0 0
  %647 = vmatpush1.bf16.msra.mxu0 %v394
  %648 = vmatprep.subr.bf16.mxu0 0
  %649 = vmatpush1.bf16.msra.mxu0 %v395
  %650 = vmatprep.subr.bf16.mxu0 0
  %651 = vmatpush1.bf16.msra.mxu0 %v396
  %652 = vmatprep.subr.bf16.mxu0 0
  %653 = vmatpush1.bf16.msra.mxu0 %v397
  %654 = vmatprep.subr.bf16.mxu0 0
  %655 = vmatpush1.bf16.msra.mxu0 %v398
  %656 = vmatprep.subr.bf16.mxu0 0
  %657 = vmatpush1.bf16.msra.mxu0 %v399
  %658 = vmatprep.subr.bf16.mxu0 0
  %659 = vmatpush1.bf16.msra.mxu0 %v400
  %660 = vmatprep.subr.bf16.mxu0 0
  %661 = vmatpush1.bf16.msra.mxu0 0
  %662 = vmatprep.subr.bf16.mxu0 0
  %663 = vmatpush1.bf16.msra.mxu0 0
  %664 = vmatprep.subr.bf16.mxu0 0
  %665 = vmatpush1.bf16.msra.mxu0 0
  %666 = vmatprep.subr.bf16.mxu0 0
  %667 = vmatpush1.bf16.msra.mxu0 0
  %668 = vmatprep.subr.bf16.mxu0 0
  %669 = vmatpush1.bf16.msra.mxu0 0
  %670 = vmatprep.subr.bf16.mxu0 0
  %671 = vmatpush1.bf16.msra.mxu0 0
  %672 = vmatprep.subr.bf16.mxu0 0
  %673 = vmatpush1.bf16.msra.mxu0 0
  %674 = vmatprep.subr.bf16.mxu0 0
  %675 = vmatpush1.bf16.msra.mxu0 0
  %676 = vmatprep.mubr.bf16.mxu0 0
  %677 = vmatmul.mubr.bf16.gmra.mrb[0].mxu0 %v643
  %v678 = vpop.f32.mrb[0].mxu0
  %v679 = vadd.f32 0.0, %v678
  %v680 = vpop.f32.mrb[0].mxu0
  %v681 = vpop.f32.mrb[0].mxu0
  %v682 = vadd.f32 0.0, %v681
  %v683 = vpop.f32.mrb[0].mxu0
  %684 = vdwg.mxu0
  %v685 = vadd.f32 %v563, %v679
  %v686 = vadd.f32 %v566, %v682
  %v687 = vtanh.pop %v685
  %v688 = vtanh.pop %v686
  %v689 = vsub.f32 %v472, %v687
  %v690 = vsub.f32 %v473, %v688
  %v691 = vmul.f32 %v624, %v689
  %v692 = vmul.f32 %v626, %v690
  %v693 = vadd.f32 %v687, %v691
  %v694 = vadd.f32 %v688, %v692
  %695 = vst [vmem:[#allocation2] sm:$0xff] %v693
  %696 = vst [vmem:[#allocation2 + $0x8] sm:$0xff] %v694
  %v697 = vpack.c.bf16 %v694, %v693
  %v699 = vunpack.c.l.b16 %v697
  %v700 = vunpack.c.h.b16 %v697
  %v701 = vpack.c.b16 %v699, %v699
  %v702 = vpack.c.b16 %v700, %v700
  %s705 = scalar_lea.vmem %s6, 8
  %706 = vst [vmem:[%s705] sm:$0xf] %v701
  %707 = vst [vmem:[%s705 + $0x4] sm:$0xf] %v702
  %v708 = vld [vmem:[#allocation2] sm:$0xff]
  %v709 = vld [vmem:[#allocation2 + $0x8] sm:$0xff]
  %s710 = scalar_lea.vmem %s0, 16
  %v711 = vld [vmem:[%s710] sm:$0xf]
  %v712 = vld [vmem:[%s710 + $0x4] sm:$0xf]
  %v715 = vunpack.c.l.b16 %v711
  %v716 = vunpack.c.l.b16 %v712
  %v717 = vpack.c.b16 %v716, %v715
  %v719 = vsel %vm108, %v717, 0
  %721 = vmatprep.subr.bf16.mxu0 %v117
  %722 = vmatpush1.bf16.msra.mxu0 %v114
  %723 = vmatprep.subr.bf16.mxu0 0
  %724 = vmatpush1.bf16.msra.mxu0 0
  %725 = vmatprep.subr.bf16.mxu0 0
  %726 = vmatpush1.bf16.msra.mxu0 0
  %727 = vmatprep.subr.bf16.mxu0 0
  %728 = vmatpush1.bf16.msra.mxu0 0
  %729 = vmatprep.subr.bf16.mxu0 0
  %730 = vmatpush1.bf16.msra.mxu0 0
  %731 = vmatprep.subr.bf16.mxu0 0
  %732 = vmatpush1.bf16.msra.mxu0 0
  %733 = vmatprep.subr.bf16.mxu0 0
  %734 = vmatpush1.bf16.msra.mxu0 0
  %735 = vmatprep.subr.bf16.mxu0 0
  %736 = vmatpush1.bf16.msra.mxu0 0
  %737 = vmatprep.subr.bf16.mxu0 0
  %738 = vmatpush1.bf16.msra.mxu0 0
  %739 = vmatprep.subr.bf16.mxu0 0
  %740 = vmatpush1.bf16.msra.mxu0 0
  %741 = vmatprep.subr.bf16.mxu0 0
  %742 = vmatpush1.bf16.msra.mxu0 0
  %743 = vmatprep.subr.bf16.mxu0 0
  %744 = vmatpush1.bf16.msra.mxu0 0
  %745 = vmatprep.subr.bf16.mxu0 0
  %746 = vmatpush1.bf16.msra.mxu0 0
  %747 = vmatprep.subr.bf16.mxu0 0
  %748 = vmatpush1.bf16.msra.mxu0 0
  %749 = vmatprep.subr.bf16.mxu0 0
  %750 = vmatpush1.bf16.msra.mxu0 0
  %751 = vmatprep.subr.bf16.mxu0 0
  %752 = vmatpush1.bf16.msra.mxu0 0
  %753 = vmatprep.mubr.bf16.mxu0 0
  %754 = vmatmul.mubr.bf16.gmra.mrb[0].mxu0 %v719
  %v755 = vpop.f32.mrb[0].mxu0
  %v756 = vadd.f32 %v74, %v755
  %v757 = vpop.f32.mrb[0].mxu0
  %v758 = vadd.f32 %v78, %v757
  %v759 = vpop.f32.mrb[0].mxu0
  %v760 = vadd.f32 %v74, %v759
  %v761 = vpop.f32.mrb[0].mxu0
  %v762 = vadd.f32 %v78, %v761
  %763 = vdwg.mxu0
  %764 = vmatprep.subr.bf16.mxu0 0
  %765 = vmatpush1.bf16.msra.mxu0 %v120
  %766 = vmatprep.subr.bf16.mxu0 0
  %767 = vmatpush1.bf16.msra.mxu0 0
  %768 = vmatprep.subr.bf16.mxu0 0
  %769 = vmatpush1.bf16.msra.mxu0 0
  %770 = vmatprep.subr.bf16.mxu0 0
  %771 = vmatpush1.bf16.msra.mxu0 0
  %772 = vmatprep.subr.bf16.mxu0 0
  %773 = vmatpush1.bf16.msra.mxu0 0
  %774 = vmatprep.subr.bf16.mxu0 0
  %775 = vmatpush1.bf16.msra.mxu0 0
  %776 = vmatprep.subr.bf16.mxu0 0
  %777 = vmatpush1.bf16.msra.mxu0 0
  %778 = vmatprep.subr.bf16.mxu0 0
  %779 = vmatpush1.bf16.msra.mxu0 0
  %780 = vmatprep.subr.bf16.mxu0 0
  %781 = vmatpush1.bf16.msra.mxu0 0
  %782 = vmatprep.subr.bf16.mxu0 0
  %783 = vmatpush1.bf16.msra.mxu0 0
  %784 = vmatprep.subr.bf16.mxu0 0
  %785 = vmatpush1.bf16.msra.mxu0 0
  %786 = vmatprep.subr.bf16.mxu0 0
  %787 = vmatpush1.bf16.msra.mxu0 0
  %788 = vmatprep.subr.bf16.mxu0 0
  %789 = vmatpush1.bf16.msra.mxu0 0
  %790 = vmatprep.subr.bf16.mxu0 0
  %791 = vmatpush1.bf16.msra.mxu0 0
  %792 = vmatprep.subr.bf16.mxu0 0
  %793 = vmatpush1.bf16.msra.mxu0 0
  %794 = vmatprep.subr.bf16.mxu0 0
  %795 = vmatpush1.bf16.msra.mxu0 0
  %796 = vmatprep.mubr.bf16.mxu0 0
  %797 = vmatmul.mubr.bf16.gmra.mrb[0].mxu0 %v719
  %v798 = vpop.f32.mrb[0].mxu0
  %v799 = vadd.f32 %v82, %v798
  %v800 = vpop.f32.mrb[0].mxu0
  %v801 = vpop.f32.mrb[0].mxu0
  %v802 = vadd.f32 %v82, %v801
  %v803 = vpop.f32.mrb[0].mxu0
  %804 = vdwg.mxu0
  %v805 = vpack.c.bf16 %v709, %v708
  %806 = vmatprep.subr.bf16.mxu0 %v256
  %807 = vmatpush1.bf16.msra.mxu0 %v255
  %808 = vmatprep.subr.bf16.mxu0 %v258
  %809 = vmatpush1.bf16.msra.mxu0 %v257
  %810 = vmatprep.subr.bf16.mxu0 %v260
  %811 = vmatpush1.bf16.msra.mxu0 %v259
  %812 = vmatprep.subr.bf16.mxu0 %v262
  %813 = vmatpush1.bf16.msra.mxu0 %v261
  %814 = vmatprep.subr.bf16.mxu0 %v264
  %815 = vmatpush1.bf16.msra.mxu0 %v263
  %816 = vmatprep.subr.bf16.mxu0 %v266
  %817 = vmatpush1.bf16.msra.mxu0 %v265
  %818 = vmatprep.subr.bf16.mxu0 %v268
  %819 = vmatpush1.bf16.msra.mxu0 %v267
  %820 = vmatprep.subr.bf16.mxu0 %v270
  %821 = vmatpush1.bf16.msra.mxu0 %v269
  %822 = vmatprep.subr.bf16.mxu0 0
  %823 = vmatpush1.bf16.msra.mxu0 0
  %824 = vmatprep.subr.bf16.mxu0 0
  %825 = vmatpush1.bf16.msra.mxu0 0
  %826 = vmatprep.subr.bf16.mxu0 0
  %827 = vmatpush1.bf16.msra.mxu0 0
  %828 = vmatprep.subr.bf16.mxu0 0
  %829 = vmatpush1.bf16.msra.mxu0 0
  %830 = vmatprep.subr.bf16.mxu0 0
  %831 = vmatpush1.bf16.msra.mxu0 0
  %832 = vmatprep.subr.bf16.mxu0 0
  %833 = vmatpush1.bf16.msra.mxu0 0
  %834 = vmatprep.subr.bf16.mxu0 0
  %835 = vmatpush1.bf16.msra.mxu0 0
  %836 = vmatprep.subr.bf16.mxu0 0
  %837 = vmatpush1.bf16.msra.mxu0 0
  %838 = vmatprep.mubr.bf16.mxu0 0
  %839 = vmatmul.mubr.bf16.gmra.mrb[0].mxu0 %v805
  %v840 = vpop.f32.mrb[0].mxu0
  %v841 = vadd.f32 0.0, %v840
  %v842 = vpop.f32.mrb[0].mxu0
  %v843 = vadd.f32 0.0, %v842
  %v844 = vpop.f32.mrb[0].mxu0
  %v845 = vadd.f32 0.0, %v844
  %v846 = vpop.f32.mrb[0].mxu0
  %v847 = vadd.f32 0.0, %v846
  %848 = vdwg.mxu0
  %v849 = vadd.f32 %v756, %v841
  %v850 = vadd.f32 %v760, %v845
  %v851 = vxor.u32 %v849, 2147483648
  %v852 = vxor.u32 %v850, 2147483648
  %v853 = vmul.f32 %v851, 1.442695
  %v854 = vpow.pop %v853
  %v855 = vmul.f32 %v852, 1.442695
  %v856 = vpow.pop %v855
  %v857 = vadd.f32 %v854, 1.0
  %v858 = vadd.f32 %v856, 1.0
  %v859 = vrcp.pop %v857
  %v860 = vmul.f32 1.0, %v859
  %v861 = vrcp.pop %v858
  %v862 = vmul.f32 1.0, %v861
  %v863 = vadd.f32 %v758, %v843
  %v864 = vadd.f32 %v762, %v847
  %v865 = vxor.u32 %v863, 2147483648
  %v866 = vxor.u32 %v864, 2147483648
  %v867 = vmul.f32 %v865, 1.442695
  %v868 = vpow.pop %v867
  %v869 = vmul.f32 %v866, 1.442695
  %v870 = vpow.pop %v869
  %v871 = vadd.f32 %v868, 1.0
  %v872 = vadd.f32 %v870, 1.0
  %v873 = vrcp.pop %v871
  %v874 = vmul.f32 1.0, %v873
  %v875 = vrcp.pop %v872
  %v876 = vmul.f32 1.0, %v875
  %v877 = vmul.f32 %v708, %v874
  %v878 = vmul.f32 %v709, %v876
  %v879 = vpack.c.bf16 %v878, %v877
  %880 = vmatprep.subr.bf16.mxu0 0
  %881 = vmatpush1.bf16.msra.mxu0 %v393
  %882 = vmatprep.subr.bf16.mxu0 0
  %883 = vmatpush1.bf16.msra.mxu0 %v394
  %884 = vmatprep.subr.bf16.mxu0 0
  %885 = vmatpush1.bf16.msra.mxu0 %v395
  %886 = vmatprep.subr.bf16.mxu0 0
  %887 = vmatpush1.bf16.msra.mxu0 %v396
  %888 = vmatprep.subr.bf16.mxu0 0
  %889 = vmatpush1.bf16.msra.mxu0 %v397
  %890 = vmatprep.subr.bf16.mxu0 0
  %891 = vmatpush1.bf16.msra.mxu0 %v398
  %892 = vmatprep.subr.bf16.mxu0 0
  %893 = vmatpush1.bf16.msra.mxu0 %v399
  %894 = vmatprep.subr.bf16.mxu0 0
  %895 = vmatpush1.bf16.msra.mxu0 %v400
  %896 = vmatprep.subr.bf16.mxu0 0
  %897 = vmatpush1.bf16.msra.mxu0 0
  %898 = vmatprep.subr.bf16.mxu0 0
  %899 = vmatpush1.bf16.msra.mxu0 0
  %900 = vmatprep.subr.bf16.mxu0 0
  %901 = vmatpush1.bf16.msra.mxu0 0
  %902 = vmatprep.subr.bf16.mxu0 0
  %903 = vmatpush1.bf16.msra.mxu0 0
  %904 = vmatprep.subr.bf16.mxu0 0
  %905 = vmatpush1.bf16.msra.mxu0 0
  %906 = vmatprep.subr.bf16.mxu0 0
  %907 = vmatpush1.bf16.msra.mxu0 0
  %908 = vmatprep.subr.bf16.mxu0 0
  %909 = vmatpush1.bf16.msra.mxu0 0
  %910 = vmatprep.subr.bf16.mxu0 0
  %911 = vmatpush1.bf16.msra.mxu0 0
  %912 = vmatprep.mubr.bf16.mxu0 0
  %913 = vmatmul.mubr.bf16.gmra.mrb[0].mxu0 %v879
  %v914 = vpop.f32.mrb[0].mxu0
  %v915 = vadd.f32 0.0, %v914
  %v916 = vpop.f32.mrb[0].mxu0
  %v917 = vpop.f32.mrb[0].mxu0
  %v918 = vadd.f32 0.0, %v917
  %v919 = vpop.f32.mrb[0].mxu0
  %920 = vdwg.mxu0
  %v921 = vadd.f32 %v799, %v915
  %v922 = vadd.f32 %v802, %v918
  %v923 = vtanh.pop %v921
  %v924 = vtanh.pop %v922
  %v925 = vsub.f32 %v708, %v923
  %v926 = vsub.f32 %v709, %v924
  %v927 = vmul.f32 %v860, %v925
  %v928 = vmul.f32 %v862, %v926
  %v929 = vadd.f32 %v923, %v927
  %v930 = vadd.f32 %v924, %v928
  %931 = vst [vmem:[#allocation2] sm:$0xff] %v929
  %932 = vst [vmem:[#allocation2 + $0x8] sm:$0xff] %v930
  %v933 = vpack.c.bf16 %v930, %v929
  %v935 = vunpack.c.l.b16 %v933
  %v936 = vunpack.c.h.b16 %v933
  %v937 = vpack.c.b16 %v935, %v935
  %v938 = vpack.c.b16 %v936, %v936
  %s941 = scalar_lea.vmem %s6, 16
  %942 = vst [vmem:[%s941] sm:$0xf] %v937
  %943 = vst [vmem:[%s941 + $0x4] sm:$0xf] %v938
  %v944 = vld [vmem:[#allocation2] sm:$0xff]
  %v945 = vld [vmem:[#allocation2 + $0x8] sm:$0xff]
  %s946 = scalar_lea.vmem %s0, 24
  %v947 = vld [vmem:[%s946] sm:$0xf]
  %v948 = vld [vmem:[%s946 + $0x4] sm:$0xf]
  %v951 = vunpack.c.l.b16 %v947
  %v952 = vunpack.c.l.b16 %v948
  %v953 = vpack.c.b16 %v952, %v951
  %v955 = vsel %vm108, %v953, 0
  %957 = vmatprep.subr.bf16.mxu0 %v117
  %958 = vmatpush1.bf16.msra.mxu0 %v114
  %959 = vmatprep.subr.bf16.mxu0 0
  %960 = vmatpush1.bf16.msra.mxu0 0
  %961 = vmatprep.subr.bf16.mxu0 0
  %962 = vmatpush1.bf16.msra.mxu0 0
  %963 = vmatprep.subr.bf16.mxu0 0
  %964 = vmatpush1.bf16.msra.mxu0 0
  %965 = vmatprep.subr.bf16.mxu0 0
  %966 = vmatpush1.bf16.msra.mxu0 0
  %967 = vmatprep.subr.bf16.mxu0 0
  %968 = vmatpush1.bf16.msra.mxu0 0
  %969 = vmatprep.subr.bf16.mxu0 0
  %970 = vmatpush1.bf16.msra.mxu0 0
  %971 = vmatprep.subr.bf16.mxu0 0
  %972 = vmatpush1.bf16.msra.mxu0 0
  %973 = vmatprep.subr.bf16.mxu0 0
  %974 = vmatpush1.bf16.msra.mxu0 0
  %975 = vmatprep.subr.bf16.mxu0 0
  %976 = vmatpush1.bf16.msra.mxu0 0
  %977 = vmatprep.subr.bf16.mxu0 0
  %978 = vmatpush1.bf16.msra.mxu0 0
  %979 = vmatprep.subr.bf16.mxu0 0
  %980 = vmatpush1.bf16.msra.mxu0 0
  %981 = vmatprep.subr.bf16.mxu0 0
  %982 = vmatpush1.bf16.msra.mxu0 0
  %983 = vmatprep.subr.bf16.mxu0 0
  %984 = vmatpush1.bf16.msra.mxu0 0
  %985 = vmatprep.subr.bf16.mxu0 0
  %986 = vmatpush1.bf16.msra.mxu0 0
  %987 = vmatprep.subr.bf16.mxu0 0
  %988 = vmatpush1.bf16.msra.mxu0 0
  %989 = vmatprep.mubr.bf16.mxu0 0
  %990 = vmatmul.mubr.bf16.gmra.mrb[0].mxu0 %v955
  %v991 = vpop.f32.mrb[0].mxu0
  %v992 = vadd.f32 %v74, %v991
  %v993 = vpop.f32.mrb[0].mxu0
  %v994 = vadd.f32 %v78, %v993
  %v995 = vpop.f32.mrb[0].mxu0
  %v996 = vadd.f32 %v74, %v995
  %v997 = vpop.f32.mrb[0].mxu0
  %v998 = vadd.f32 %v78, %v997
  %999 = vdwg.mxu0
  %1000 = vmatprep.subr.bf16.mxu0 0
  %1001 = vmatpush1.bf16.msra.mxu0 %v120
  %1002 = vmatprep.subr.bf16.mxu0 0
  %1003 = vmatpush1.bf16.msra.mxu0 0
  %1004 = vmatprep.subr.bf16.mxu0 0
  %1005 = vmatpush1.bf16.msra.mxu0 0
  %1006 = vmatprep.subr.bf16.mxu0 0
  %1007 = vmatpush1.bf16.msra.mxu0 0
  %1008 = vmatprep.subr.bf16.mxu0 0
  %1009 = vmatpush1.bf16.msra.mxu0 0
  %1010 = vmatprep.subr.bf16.mxu0 0
  %1011 = vmatpush1.bf16.msra.mxu0 0
  %1012 = vmatprep.subr.bf16.mxu0 0
  %1013 = vmatpush1.bf16.msra.mxu0 0
  %1014 = vmatprep.subr.bf16.mxu0 0
  %1015 = vmatpush1.bf16.msra.mxu0 0
  %1016 = vmatprep.subr.bf16.mxu0 0
  %1017 = vmatpush1.bf16.msra.mxu0 0
  %1018 = vmatprep.subr.bf16.mxu0 0
  %1019 = vmatpush1.bf16.msra.mxu0 0
  %1020 = vmatprep.subr.bf16.mxu0 0
  %1021 = vmatpush1.bf16.msra.mxu0 0
  %1022 = vmatprep.subr.bf16.mxu0 0
  %1023 = vmatpush1.bf16.msra.mxu0 0
  %1024 = vmatprep.subr.bf16.mxu0 0
  %1025 = vmatpush1.bf16.msra.mxu0 0
  %1026 = vmatprep.subr.bf16.mxu0 0
  %1027 = vmatpush1.bf16.msra.mxu0 0
  %1028 = vmatprep.subr.bf16.mxu0 0
  %1029 = vmatpush1.bf16.msra.mxu0 0
  %1030 = vmatprep.subr.bf16.mxu0 0
  %1031 = vmatpush1.bf16.msra.mxu0 0
  %1032 = vmatprep.mubr.bf16.mxu0 0
  %1033 = vmatmul.mubr.bf16.gmra.mrb[0].mxu0 %v955
  %v1034 = vpop.f32.mrb[0].mxu0
  %v1035 = vadd.f32 %v82, %v1034
  %v1036 = vpop.f32.mrb[0].mxu0
  %v1037 = vpop.f32.mrb[0].mxu0
  %v1038 = vadd.f32 %v82, %v1037
  %v1039 = vpop.f32.mrb[0].mxu0
  %1040 = vdwg.mxu0
  %v1041 = vpack.c.bf16 %v945, %v944
  %1042 = vmatprep.subr.bf16.mxu0 %v256
  %1043 = vmatpush1.bf16.msra.mxu0 %v255
  %1044 = vmatprep.subr.bf16.mxu0 %v258
  %1045 = vmatpush1.bf16.msra.mxu0 %v257
  %1046 = vmatprep.subr.bf16.mxu0 %v260
  %1047 = vmatpush1.bf16.msra.mxu0 %v259
  %1048 = vmatprep.subr.bf16.mxu0 %v262
  %1049 = vmatpush1.bf16.msra.mxu0 %v261
  %1050 = vmatprep.subr.bf16.mxu0 %v264
  %1051 = vmatpush1.bf16.msra.mxu0 %v263
  %1052 = vmatprep.subr.bf16.mxu0 %v266
  %1053 = vmatpush1.bf16.msra.mxu0 %v265
  %1054 = vmatprep.subr.bf16.mxu0 %v268
  %1055 = vmatpush1.bf16.msra.mxu0 %v267
  %1056 = vmatprep.subr.bf16.mxu0 %v270
  %1057 = vmatpush1.bf16.msra.mxu0 %v269
  %1058 = vmatprep.subr.bf16.mxu0 0
  %1059 = vmatpush1.bf16.msra.mxu0 0
  %1060 = vmatprep.subr.bf16.mxu0 0
  %1061 = vmatpush1.bf16.msra.mxu0 0
  %1062 = vmatprep.subr.bf16.mxu0 0
  %1063 = vmatpush1.bf16.msra.mxu0 0
  %1064 = vmatprep.subr.bf16.mxu0 0
  %1065 = vmatpush1.bf16.msra.mxu0 0
  %1066 = vmatprep.subr.bf16.mxu0 0
  %1067 = vmatpush1.bf16.msra.mxu0 0
  %1068 = vmatprep.subr.bf16.mxu0 0
  %1069 = vmatpush1.bf16.msra.mxu0 0
  %1070 = vmatprep.subr.bf16.mxu0 0
  %1071 = vmatpush1.bf16.msra.mxu0 0
  %1072 = vmatprep.subr.bf16.mxu0 0
  %1073 = vmatpush1.bf16.msra.mxu0 0
  %1074 = vmatprep.mubr.bf16.mxu0 0
  %1075 = vmatmul.mubr.bf16.gmra.mrb[0].mxu0 %v1041
  %v1076 = vpop.f32.mrb[0].mxu0
  %v1077 = vadd.f32 0.0, %v1076
  %v1078 = vpop.f32.mrb[0].mxu0
  %v1079 = vadd.f32 0.0, %v1078
  %v1080 = vpop.f32.mrb[0].mxu0
  %v1081 = vadd.f32 0.0, %v1080
  %v1082 = vpop.f32.mrb[0].mxu0
  %v1083 = vadd.f32 0.0, %v1082
  %1084 = vdwg.mxu0
  %v1085 = vadd.f32 %v992, %v1077
  %v1086 = vadd.f32 %v996, %v1081
  %v1087 = vxor.u32 %v1085, 2147483648
  %v1088 = vxor.u32 %v1086, 2147483648
  %v1089 = vmul.f32 %v1087, 1.442695
  %v1090 = vpow.pop %v1089
  %v1091 = vmul.f32 %v1088, 1.442695
  %v1092 = vpow.pop %v1091
  %v1093 = vadd.f32 %v1090, 1.0
  %v1094 = vadd.f32 %v1092, 1.0
  %v1095 = vrcp.pop %v1093
  %v1096 = vmul.f32 1.0, %v1095
  %v1097 = vrcp.pop %v1094
  %v1098 = vmul.f32 1.0, %v1097
  %v1099 = vadd.f32 %v994, %v1079
  %v1100 = vadd.f32 %v998, %v1083
  %v1101 = vxor.u32 %v1099, 2147483648
  %v1102 = vxor.u32 %v1100, 2147483648
  %v1103 = vmul.f32 %v1101, 1.442695
  %v1104 = vpow.pop %v1103
  %v1105 = vmul.f32 %v1102, 1.442695
  %v1106 = vpow.pop %v1105
  %v1107 = vadd.f32 %v1104, 1.0
  %v1108 = vadd.f32 %v1106, 1.0
  %v1109 = vrcp.pop %v1107
  %v1110 = vmul.f32 1.0, %v1109
  %v1111 = vrcp.pop %v1108
  %v1112 = vmul.f32 1.0, %v1111
  %v1113 = vmul.f32 %v944, %v1110
  %v1114 = vmul.f32 %v945, %v1112
  %v1115 = vpack.c.bf16 %v1114, %v1113
  %1116 = vmatprep.subr.bf16.mxu0 0
  %1117 = vmatpush1.bf16.msra.mxu0 %v393
  %1118 = vmatprep.subr.bf16.mxu0 0
  %1119 = vmatpush1.bf16.msra.mxu0 %v394
  %1120 = vmatprep.subr.bf16.mxu0 0
  %1121 = vmatpush1.bf16.msra.mxu0 %v395
  %1122 = vmatprep.subr.bf16.mxu0 0
  %1123 = vmatpush1.bf16.msra.mxu0 %v396
  %1124 = vmatprep.subr.bf16.mxu0 0
  %1125 = vmatpush1.bf16.msra.mxu0 %v397
  %1126 = vmatprep.subr.bf16.mxu0 0
  %1127 = vmatpush1.bf16.msra.mxu0 %v398
  %1128 = vmatprep.subr.bf16.mxu0 0
  %1129 = vmatpush1.bf16.msra.mxu0 %v399
  %1130 = vmatprep.subr.bf16.mxu0 0
  %1131 = vmatpush1.bf16.msra.mxu0 %v400
  %1132 = vmatprep.subr.bf16.mxu0 0
  %1133 = vmatpush1.bf16.msra.mxu0 0
  %1134 = vmatprep.subr.bf16.mxu0 0
  %1135 = vmatpush1.bf16.msra.mxu0 0
  %1136 = vmatprep.subr.bf16.mxu0 0
  %1137 = vmatpush1.bf16.msra.mxu0 0
  %1138 = vmatprep.subr.bf16.mxu0 0
  %1139 = vmatpush1.bf16.msra.mxu0 0
  %1140 = vmatprep.subr.bf16.mxu0 0
  %1141 = vmatpush1.bf16.msra.mxu0 0
  %1142 = vmatprep.subr.bf16.mxu0 0
  %1143 = vmatpush1.bf16.msra.mxu0 0
  %1144 = vmatprep.subr.bf16.mxu0 0
  %1145 = vmatpush1.bf16.msra.mxu0 0
  %1146 = vmatprep.subr.bf16.mxu0 0
  %1147 = vmatpush1.bf16.msra.mxu0 0
  %1148 = vmatprep.mubr.bf16.mxu0 0
  %1149 = vmatmul.mubr.bf16.gmra.mrb[0].mxu0 %v1115
  %v1150 = vpop.f32.mrb[0].mxu0
  %v1151 = vadd.f32 0.0, %v1150
  %v1152 = vpop.f32.mrb[0].mxu0
  %v1153 = vpop.f32.mrb[0].mxu0
  %v1154 = vadd.f32 0.0, %v1153
  %v1155 = vpop.f32.mrb[0].mxu0
  %1156 = vdwg.mxu0
  %v1157 = vadd.f32 %v1035, %v1151
  %v1158 = vadd.f32 %v1038, %v1154
  %v1159 = vtanh.pop %v1157
  %v1160 = vtanh.pop %v1158
  %v1161 = vsub.f32 %v944, %v1159
  %v1162 = vsub.f32 %v945, %v1160
  %v1163 = vmul.f32 %v1096, %v1161
  %v1164 = vmul.f32 %v1098, %v1162
  %v1165 = vadd.f32 %v1159, %v1163
  %v1166 = vadd.f32 %v1160, %v1164
  %1167 = vst [vmem:[#allocation2] sm:$0xff] %v1165
  %1168 = vst [vmem:[#allocation2 + $0x8] sm:$0xff] %v1166
  %v1169 = vpack.c.bf16 %v1166, %v1165
  %v1171 = vunpack.c.l.b16 %v1169
  %v1172 = vunpack.c.h.b16 %v1169
  %v1173 = vpack.c.b16 %v1171, %v1171
  %v1174 = vpack.c.b16 %v1172, %v1172
  %s1177 = scalar_lea.vmem %s6, 24
  %1178 = vst [vmem:[%s1177] sm:$0xf] %v1173
  %1179 = vst [vmem:[%s1177 + $0x4] sm:$0xf] %v1174
  %v1180 = vld [vmem:[#allocation2] sm:$0xff]
  %v1181 = vld [vmem:[#allocation2 + $0x8] sm:$0xff]
  %s1182 = scalar_lea.vmem %s0, 32
  %v1183 = vld [vmem:[%s1182] sm:$0xf]
  %v1184 = vld [vmem:[%s1182 + $0x4] sm:$0xf]
  %v1187 = vunpack.c.l.b16 %v1183
  %v1188 = vunpack.c.l.b16 %v1184
  %v1189 = vpack.c.b16 %v1188, %v1187
  %v1191 = vsel %vm108, %v1189, 0
  %1193 = vmatprep.subr.bf16.mxu0 %v117
  %1194 = vmatpush1.bf16.msra.mxu0 %v114
  %1195 = vmatprep.subr.bf16.mxu0 0
  %1196 = vmatpush1.bf16.msra.mxu0 0
  %1197 = vmatprep.subr.bf16.mxu0 0
  %1198 = vmatpush1.bf16.msra.mxu0 0
  %1199 = vmatprep.subr.bf16.mxu0 0
  %1200 = vmatpush1.bf16.msra.mxu0 0
  %1201 = vmatprep.subr.bf16.mxu0 0
  %1202 = vmatpush1.bf16.msra.mxu0 0
  %1203 = vmatprep.subr.bf16.mxu0 0
  %1204 = vmatpush1.bf16.msra.mxu0 0
  %1205 = vmatprep.subr.bf16.mxu0 0
  %1206 = vmatpush1.bf16.msra.mxu0 0
  %1207 = vmatprep.subr.bf16.mxu0 0
  %1208 = vmatpush1.bf16.msra.mxu0 0
  %1209 = vmatprep.subr.bf16.mxu0 0
  %1210 = vmatpush1.bf16.msra.mxu0 0
  %1211 = vmatprep.subr.bf16.mxu0 0
  %1212 = vmatpush1.bf16.msra.mxu0 0
  %1213 = vmatprep.subr.bf16.mxu0 0
  %1214 = vmatpush1.bf16.msra.mxu0 0
  %1215 = vmatprep.subr.bf16.mxu0 0
  %1216 = vmatpush1.bf16.msra.mxu0 0
  %1217 = vmatprep.subr.bf16.mxu0 0
  %1218 = vmatpush1.bf16.msra.mxu0 0
  %1219 = vmatprep.subr.bf16.mxu0 0
  %1220 = vmatpush1.bf16.msra.mxu0 0
  %1221 = vmatprep.subr.bf16.mxu0 0
  %1222 = vmatpush1.bf16.msra.mxu0 0
  %1223 = vmatprep.subr.bf16.mxu0 0
  %1224 = vmatpush1.bf16.msra.mxu0 0
  %1225 = vmatprep.mubr.bf16.mxu0 0
  %1226 = vmatmul.mubr.bf16.gmra.mrb[0].mxu0 %v1191
  %v1227 = vpop.f32.mrb[0].mxu0
  %v1228 = vadd.f32 %v74, %v1227
  %v1229 = vpop.f32.mrb[0].mxu0
  %v1230 = vadd.f32 %v78, %v1229
  %v1231 = vpop.f32.mrb[0].mxu0
  %v1232 = vadd.f32 %v74, %v1231
  %v1233 = vpop.f32.mrb[0].mxu0
  %v1234 = vadd.f32 %v78, %v1233
  %1235 = vdwg.mxu0
  %1236 = vmatprep.subr.bf16.mxu0 0
  %1237 = vmatpush1.bf16.msra.mxu0 %v120
  %1238 = vmatprep.subr.bf16.mxu0 0
  %1239 = vmatpush1.bf16.msra.mxu0 0
  %1240 = vmatprep.subr.bf16.mxu0 0
  %1241 = vmatpush1.bf16.msra.mxu0 0
  %1242 = vmatprep.subr.bf16.mxu0 0
  %1243 = vmatpush1.bf16.msra.mxu0 0
  %1244 = vmatprep.subr.bf16.mxu0 0
  %1245 = vmatpush1.bf16.msra.mxu0 0
  %1246 = vmatprep.subr.bf16.mxu0 0
  %1247 = vmatpush1.bf16.msra.mxu0 0
  %1248 = vmatprep.subr.bf16.mxu0 0
  %1249 = vmatpush1.bf16.msra.mxu0 0
  %1250 = vmatprep.subr.bf16.mxu0 0
  %1251 = vmatpush1.bf16.msra.mxu0 0
  %1252 = vmatprep.subr.bf16.mxu0 0
  %1253 = vmatpush1.bf16.msra.mxu0 0
  %1254 = vmatprep.subr.bf16.mxu0 0
  %1255 = vmatpush1.bf16.msra.mxu0 0
  %1256 = vmatprep.subr.bf16.mxu0 0
  %1257 = vmatpush1.bf16.msra.mxu0 0
  %1258 = vmatprep.subr.bf16.mxu0 0
  %1259 = vmatpush1.bf16.msra.mxu0 0
  %1260 = vmatprep.subr.bf16.mxu0 0
  %1261 = vmatpush1.bf16.msra.mxu0 0
  %1262 = vmatprep.subr.bf16.mxu0 0
  %1263 = vmatpush1.bf16.msra.mxu0 0
  %1264 = vmatprep.subr.bf16.mxu0 0
  %1265 = vmatpush1.bf16.msra.mxu0 0
  %1266 = vmatprep.subr.bf16.mxu0 0
  %1267 = vmatpush1.bf16.msra.mxu0 0
  %1268 = vmatprep.mubr.bf16.mxu0 0
  %1269 = vmatmul.mubr.bf16.gmra.mrb[0].mxu0 %v1191
  %v1270 = vpop.f32.mrb[0].mxu0
  %v1271 = vadd.f32 %v82, %v1270
  %v1272 = vpop.f32.mrb[0].mxu0
  %v1273 = vpop.f32.mrb[0].mxu0
  %v1274 = vadd.f32 %v82, %v1273
  %v1275 = vpop.f32.mrb[0].mxu0
  %1276 = vdwg.mxu0
  %v1277 = vpack.c.bf16 %v1181, %v1180
  %1278 = vmatprep.subr.bf16.mxu0 %v256
  %1279 = vmatpush1.bf16.msra.mxu0 %v255
  %1280 = vmatprep.subr.bf16.mxu0 %v258
  %1281 = vmatpush1.bf16.msra.mxu0 %v257
  %1282 = vmatprep.subr.bf16.mxu0 %v260
  %1283 = vmatpush1.bf16.msra.mxu0 %v259
  %1284 = vmatprep.subr.bf16.mxu0 %v262
  %1285 = vmatpush1.bf16.msra.mxu0 %v261
  %1286 = vmatprep.subr.bf16.mxu0 %v264
  %1287 = vmatpush1.bf16.msra.mxu0 %v263
  %1288 = vmatprep.subr.bf16.mxu0 %v266
  %1289 = vmatpush1.bf16.msra.mxu0 %v265
  %1290 = vmatprep.subr.bf16.mxu0 %v268
  %1291 = vmatpush1.bf16.msra.mxu0 %v267
  %1292 = vmatprep.subr.bf16.mxu0 %v270
  %1293 = vmatpush1.bf16.msra.mxu0 %v269
  %1294 = vmatprep.subr.bf16.mxu0 0
  %1295 = vmatpush1.bf16.msra.mxu0 0
  %1296 = vmatprep.subr.bf16.mxu0 0
  %1297 = vmatpush1.bf16.msra.mxu0 0
  %1298 = vmatprep.subr.bf16.mxu0 0
  %1299 = vmatpush1.bf16.msra.mxu0 0
  %1300 = vmatprep.subr.bf16.mxu0 0
  %1301 = vmatpush1.bf16.msra.mxu0 0
  %1302 = vmatprep.subr.bf16.mxu0 0
  %1303 = vmatpush1.bf16.msra.mxu0 0
  %1304 = vmatprep.subr.bf16.mxu0 0
  %1305 = vmatpush1.bf16.msra.mxu0 0
  %1306 = vmatprep.subr.bf16.mxu0 0
  %1307 = vmatpush1.bf16.msra.mxu0 0
  %1308 = vmatprep.subr.bf16.mxu0 0
  %1309 = vmatpush1.bf16.msra.mxu0 0
  %1310 = vmatprep.mubr.bf16.mxu0 0
  %1311 = vmatmul.mubr.bf16.gmra.mrb[0].mxu0 %v1277
  %v1312 = vpop.f32.mrb[0].mxu0
  %v1313 = vadd.f32 0.0, %v1312
  %v1314 = vpop.f32.mrb[0].mxu0
  %v1315 = vadd.f32 0.0, %v1314
  %v1316 = vpop.f32.mrb[0].mxu0
  %v1317 = vadd.f32 0.0, %v1316
  %v1318 = vpop.f32.mrb[0].mxu0
  %v1319 = vadd.f32 0.0, %v1318
  %1320 = vdwg.mxu0
  %v1321 = vadd.f32 %v1228, %v1313
  %v1322 = vadd.f32 %v1232, %v1317
  %v1323 = vxor.u32 %v1321, 2147483648
  %v1324 = vxor.u32 %v1322, 2147483648
  %v1325 = vmul.f32 %v1323, 1.442695
  %v1326 = vpow.pop %v1325
  %v1327 = vmul.f32 %v1324, 1.442695
  %v1328 = vpow.pop %v1327
  %v1329 = vadd.f32 %v1326, 1.0
  %v1330 = vadd.f32 %v1328, 1.0
  %v1331 = vrcp.pop %v1329
  %v1332 = vmul.f32 1.0, %v1331
  %v1333 = vrcp.pop %v1330
  %v1334 = vmul.f32 1.0, %v1333
  %v1335 = vadd.f32 %v1230, %v1315
  %v1336 = vadd.f32 %v1234, %v1319
  %v1337 = vxor.u32 %v1335, 2147483648
  %v1338 = vxor.u32 %v1336, 2147483648
  %v1339 = vmul.f32 %v1337, 1.442695
  %v1340 = vpow.pop %v1339
  %v1341 = vmul.f32 %v1338, 1.442695
  %v1342 = vpow.pop %v1341
  %v1343 = vadd.f32 %v1340, 1.0
  %v1344 = vadd.f32 %v1342, 1.0
  %v1345 = vrcp.pop %v1343
  %v1346 = vmul.f32 1.0, %v1345
  %v1347 = vrcp.pop %v1344
  %v1348 = vmul.f32 1.0, %v1347
  %v1349 = vmul.f32 %v1180, %v1346
  %v1350 = vmul.f32 %v1181, %v1348
  %v1351 = vpack.c.bf16 %v1350, %v1349
  %1352 = vmatprep.subr.bf16.mxu0 0
  %1353 = vmatpush1.bf16.msra.mxu0 %v393
  %1354 = vmatprep.subr.bf16.mxu0 0
  %1355 = vmatpush1.bf16.msra.mxu0 %v394
  %1356 = vmatprep.subr.bf16.mxu0 0
  %1357 = vmatpush1.bf16.msra.mxu0 %v395
  %1358 = vmatprep.subr.bf16.mxu0 0
  %1359 = vmatpush1.bf16.msra.mxu0 %v396
  %1360 = vmatprep.subr.bf16.mxu0 0
  %1361 = vmatpush1.bf16.msra.mxu0 %v397
  %1362 = vmatprep.subr.bf16.mxu0 0
  %1363 = vmatpush1.bf16.msra.mxu0 %v398
  %1364 = vmatprep.subr.bf16.mxu0 0
  %1365 = vmatpush1.bf16.msra.mxu0 %v399
  %1366 = vmatprep.subr.bf16.mxu0 0
  %1367 = vmatpush1.bf16.msra.mxu0 %v400
  %1368 = vmatprep.subr.bf16.mxu0 0
  %1369 = vmatpush1.bf16.msra.mxu0 0
  %1370 = vmatprep.subr.bf16.mxu0 0
  %1371 = vmatpush1.bf16.msra.mxu0 0
  %1372 = vmatprep.subr.bf16.mxu0 0
  %1373 = vmatpush1.bf16.msra.mxu0 0
  %1374 = vmatprep.subr.bf16.mxu0 0
  %1375 = vmatpush1.bf16.msra.mxu0 0
  %1376 = vmatprep.subr.bf16.mxu0 0
  %1377 = vmatpush1.bf16.msra.mxu0 0
  %1378 = vmatprep.subr.bf16.mxu0 0
  %1379 = vmatpush1.bf16.msra.mxu0 0
  %1380 = vmatprep.subr.bf16.mxu0 0
  %1381 = vmatpush1.bf16.msra.mxu0 0
  %1382 = vmatprep.subr.bf16.mxu0 0
  %1383 = vmatpush1.bf16.msra.mxu0 0
  %1384 = vmatprep.mubr.bf16.mxu0 0
  %1385 = vmatmul.mubr.bf16.gmra.mrb[0].mxu0 %v1351
  %v1386 = vpop.f32.mrb[0].mxu0
  %v1387 = vadd.f32 0.0, %v1386
  %v1388 = vpop.f32.mrb[0].mxu0
  %v1389 = vpop.f32.mrb[0].mxu0
  %v1390 = vadd.f32 0.0, %v1389
  %v1391 = vpop.f32.mrb[0].mxu0
  %1392 = vdwg.mxu0
  %v1393 = vadd.f32 %v1271, %v1387
  %v1394 = vadd.f32 %v1274, %v1390
  %v1395 = vtanh.pop %v1393
  %v1396 = vtanh.pop %v1394
  %v1397 = vsub.f32 %v1180, %v1395
  %v1398 = vsub.f32 %v1181, %v1396
  %v1399 = vmul.f32 %v1332, %v1397
  %v1400 = vmul.f32 %v1334, %v1398
  %v1401 = vadd.f32 %v1395, %v1399
  %v1402 = vadd.f32 %v1396, %v1400
  %1403 = vst [vmem:[#allocation2] sm:$0xff] %v1401
  %1404 = vst [vmem:[#allocation2 + $0x8] sm:$0xff] %v1402
  %v1405 = vpack.c.bf16 %v1402, %v1401
  %v1407 = vunpack.c.l.b16 %v1405
  %v1408 = vunpack.c.h.b16 %v1405
  %v1409 = vpack.c.b16 %v1407, %v1407
  %v1410 = vpack.c.b16 %v1408, %v1408
  %s1413 = scalar_lea.vmem %s6, 32
  %1414 = vst [vmem:[%s1413] sm:$0xf] %v1409
  %1415 = vst [vmem:[%s1413 + $0x4] sm:$0xf] %v1410
  %v1416 = vld [vmem:[#allocation2] sm:$0xff]
  %v1417 = vld [vmem:[#allocation2 + $0x8] sm:$0xff]
  %s1418 = scalar_lea.vmem %s0, 40
  %v1419 = vld [vmem:[%s1418] sm:$0xf]
  %v1420 = vld [vmem:[%s1418 + $0x4] sm:$0xf]
  %v1423 = vunpack.c.l.b16 %v1419
  %v1424 = vunpack.c.l.b16 %v1420
  %v1425 = vpack.c.b16 %v1424, %v1423
  %v1427 = vsel %vm108, %v1425, 0
  %1429 = vmatprep.subr.bf16.mxu0 %v117
  %1430 = vmatpush1.bf16.msra.mxu0 %v114
  %1431 = vmatprep.subr.bf16.mxu0 0
  %1432 = vmatpush1.bf16.msra.mxu0 0
  %1433 = vmatprep.subr.bf16.mxu0 0
  %1434 = vmatpush1.bf16.msra.mxu0 0
  %1435 = vmatprep.subr.bf16.mxu0 0
  %1436 = vmatpush1.bf16.msra.mxu0 0
  %1437 = vmatprep.subr.bf16.mxu0 0
  %1438 = vmatpush1.bf16.msra.mxu0 0
  %1439 = vmatprep.subr.bf16.mxu0 0
  %1440 = vmatpush1.bf16.msra.mxu0 0
  %1441 = vmatprep.subr.bf16.mxu0 0
  %1442 = vmatpush1.bf16.msra.mxu0 0
  %1443 = vmatprep.subr.bf16.mxu0 0
  %1444 = vmatpush1.bf16.msra.mxu0 0
  %1445 = vmatprep.subr.bf16.mxu0 0
  %1446 = vmatpush1.bf16.msra.mxu0 0
  %1447 = vmatprep.subr.bf16.mxu0 0
  %1448 = vmatpush1.bf16.msra.mxu0 0
  %1449 = vmatprep.subr.bf16.mxu0 0
  %1450 = vmatpush1.bf16.msra.mxu0 0
  %1451 = vmatprep.subr.bf16.mxu0 0
  %1452 = vmatpush1.bf16.msra.mxu0 0
  %1453 = vmatprep.subr.bf16.mxu0 0
  %1454 = vmatpush1.bf16.msra.mxu0 0
  %1455 = vmatprep.subr.bf16.mxu0 0
  %1456 = vmatpush1.bf16.msra.mxu0 0
  %1457 = vmatprep.subr.bf16.mxu0 0
  %1458 = vmatpush1.bf16.msra.mxu0 0
  %1459 = vmatprep.subr.bf16.mxu0 0
  %1460 = vmatpush1.bf16.msra.mxu0 0
  %1461 = vmatprep.mubr.bf16.mxu0 0
  %1462 = vmatmul.mubr.bf16.gmra.mrb[0].mxu0 %v1427
  %v1463 = vpop.f32.mrb[0].mxu0
  %v1464 = vadd.f32 %v74, %v1463
  %v1465 = vpop.f32.mrb[0].mxu0
  %v1466 = vadd.f32 %v78, %v1465
  %v1467 = vpop.f32.mrb[0].mxu0
  %v1468 = vadd.f32 %v74, %v1467
  %v1469 = vpop.f32.mrb[0].mxu0
  %v1470 = vadd.f32 %v78, %v1469
  %1471 = vdwg.mxu0
  %1472 = vmatprep.subr.bf16.mxu0 0
  %1473 = vmatpush1.bf16.msra.mxu0 %v120
  %1474 = vmatprep.subr.bf16.mxu0 0
  %1475 = vmatpush1.bf16.msra.mxu0 0
  %1476 = vmatprep.subr.bf16.mxu0 0
  %1477 = vmatpush1.bf16.msra.mxu0 0
  %1478 = vmatprep.subr.bf16.mxu0 0
  %1479 = vmatpush1.bf16.msra.mxu0 0
  %1480 = vmatprep.subr.bf16.mxu0 0
  %1481 = vmatpush1.bf16.msra.mxu0 0
  %1482 = vmatprep.subr.bf16.mxu0 0
  %1483 = vmatpush1.bf16.msra.mxu0 0
  %1484 = vmatprep.subr.bf16.mxu0 0
  %1485 = vmatpush1.bf16.msra.mxu0 0
  %1486 = vmatprep.subr.bf16.mxu0 0
  %1487 = vmatpush1.bf16.msra.mxu0 0
  %1488 = vmatprep.subr.bf16.mxu0 0
  %1489 = vmatpush1.bf16.msra.mxu0 0
  %1490 = vmatprep.subr.bf16.mxu0 0
  %1491 = vmatpush1.bf16.msra.mxu0 0
  %1492 = vmatprep.subr.bf16.mxu0 0
  %1493 = vmatpush1.bf16.msra.mxu0 0
  %1494 = vmatprep.subr.bf16.mxu0 0
  %1495 = vmatpush1.bf16.msra.mxu0 0
  %1496 = vmatprep.subr.bf16.mxu0 0
  %1497 = vmatpush1.bf16.msra.mxu0 0
  %1498 = vmatprep.subr.bf16.mxu0 0
  %1499 = vmatpush1.bf16.msra.mxu0 0
  %1500 = vmatprep.subr.bf16.mxu0 0
  %1501 = vmatpush1.bf16.msra.mxu0 0
  %1502 = vmatprep.subr.bf16.mxu0 0
  %1503 = vmatpush1.bf16.msra.mxu0 0
  %1504 = vmatprep.mubr.bf16.mxu0 0
  %1505 = vmatmul.mubr.bf16.gmra.mrb[0].mxu0 %v1427
  %v1506 = vpop.f32.mrb[0].mxu0
  %v1507 = vadd.f32 %v82, %v1506
  %v1508 = vpop.f32.mrb[0].mxu0
  %v1509 = vpop.f32.mrb[0].mxu0
  %v1510 = vadd.f32 %v82, %v1509
  %v1511 = vpop.f32.mrb[0].mxu0
  %1512 = vdwg.mxu0
  %v1513 = vpack.c.bf16 %v1417, %v1416
  %1514 = vmatprep.subr.bf16.mxu0 %v256
  %1515 = vmatpush1.bf16.msra.mxu0 %v255
  %1516 = vmatprep.subr.bf16.mxu0 %v258
  %1517 = vmatpush1.bf16.msra.mxu0 %v257
  %1518 = vmatprep.subr.bf16.mxu0 %v260
  %1519 = vmatpush1.bf16.msra.mxu0 %v259
  %1520 = vmatprep.subr.bf16.mxu0 %v262
  %1521 = vmatpush1.bf16.msra.mxu0 %v261
  %1522 = vmatprep.subr.bf16.mxu0 %v264
  %1523 = vmatpush1.bf16.msra.mxu0 %v263
  %1524 = vmatprep.subr.bf16.mxu0 %v266
  %1525 = vmatpush1.bf16.msra.mxu0 %v265
  %1526 = vmatprep.subr.bf16.mxu0 %v268
  %1527 = vmatpush1.bf16.msra.mxu0 %v267
  %1528 = vmatprep.subr.bf16.mxu0 %v270
  %1529 = vmatpush1.bf16.msra.mxu0 %v269
  %1530 = vmatprep.subr.bf16.mxu0 0
  %1531 = vmatpush1.bf16.msra.mxu0 0
  %1532 = vmatprep.subr.bf16.mxu0 0
  %1533 = vmatpush1.bf16.msra.mxu0 0
  %1534 = vmatprep.subr.bf16.mxu0 0
  %1535 = vmatpush1.bf16.msra.mxu0 0
  %1536 = vmatprep.subr.bf16.mxu0 0
  %1537 = vmatpush1.bf16.msra.mxu0 0
  %1538 = vmatprep.subr.bf16.mxu0 0
  %1539 = vmatpush1.bf16.msra.mxu0 0
  %1540 = vmatprep.subr.bf16.mxu0 0
  %1541 = vmatpush1.bf16.msra.mxu0 0
  %1542 = vmatprep.subr.bf16.mxu0 0
  %1543 = vmatpush1.bf16.msra.mxu0 0
  %1544 = vmatprep.subr.bf16.mxu0 0
  %1545 = vmatpush1.bf16.msra.mxu0 0
  %1546 = vmatprep.mubr.bf16.mxu0 0
  %1547 = vmatmul.mubr.bf16.gmra.mrb[0].mxu0 %v1513
  %v1548 = vpop.f32.mrb[0].mxu0
  %v1549 = vadd.f32 0.0, %v1548
  %v1550 = vpop.f32.mrb[0].mxu0
  %v1551 = vadd.f32 0.0, %v1550
  %v1552 = vpop.f32.mrb[0].mxu0
  %v1553 = vadd.f32 0.0, %v1552
  %v1554 = vpop.f32.mrb[0].mxu0
  %v1555 = vadd.f32 0.0, %v1554
  %1556 = vdwg.mxu0
  %v1557 = vadd.f32 %v1464, %v1549
  %v1558 = vadd.f32 %v1468, %v1553
  %v1559 = vxor.u32 %v1557, 2147483648
  %v1560 = vxor.u32 %v1558, 2147483648
  %v1561 = vmul.f32 %v1559, 1.442695
  %v1562 = vpow.pop %v1561
  %v1563 = vmul.f32 %v1560, 1.442695
  %v1564 = vpow.pop %v1563
  %v1565 = vadd.f32 %v1562, 1.0
  %v1566 = vadd.f32 %v1564, 1.0
  %v1567 = vrcp.pop %v1565
  %v1568 = vmul.f32 1.0, %v1567
  %v1569 = vrcp.pop %v1566
  %v1570 = vmul.f32 1.0, %v1569
  %v1571 = vadd.f32 %v1466, %v1551
  %v1572 = vadd.f32 %v1470, %v1555
  %v1573 = vxor.u32 %v1571, 2147483648
  %v1574 = vxor.u32 %v1572, 2147483648
  %v1575 = vmul.f32 %v1573, 1.442695
  %v1576 = vpow.pop %v1575
  %v1577 = vmul.f32 %v1574, 1.442695
  %v1578 = vpow.pop %v1577
  %v1579 = vadd.f32 %v1576, 1.0
  %v1580 = vadd.f32 %v1578, 1.0
  %v1581 = vrcp.pop %v1579
  %v1582 = vmul.f32 1.0, %v1581
  %v1583 = vrcp.pop %v1580
  %v1584 = vmul.f32 1.0, %v1583
  %v1585 = vmul.f32 %v1416, %v1582
  %v1586 = vmul.f32 %v1417, %v1584
  %v1587 = vpack.c.bf16 %v1586, %v1585
  %1588 = vmatprep.subr.bf16.mxu0 0
  %1589 = vmatpush1.bf16.msra.mxu0 %v393
  %1590 = vmatprep.subr.bf16.mxu0 0
  %1591 = vmatpush1.bf16.msra.mxu0 %v394
  %1592 = vmatprep.subr.bf16.mxu0 0
  %1593 = vmatpush1.bf16.msra.mxu0 %v395
  %1594 = vmatprep.subr.bf16.mxu0 0
  %1595 = vmatpush1.bf16.msra.mxu0 %v396
  %1596 = vmatprep.subr.bf16.mxu0 0
  %1597 = vmatpush1.bf16.msra.mxu0 %v397
  %1598 = vmatprep.subr.bf16.mxu0 0
  %1599 = vmatpush1.bf16.msra.mxu0 %v398
  %1600 = vmatprep.subr.bf16.mxu0 0
  %1601 = vmatpush1.bf16.msra.mxu0 %v399
  %1602 = vmatprep.subr.bf16.mxu0 0
  %1603 = vmatpush1.bf16.msra.mxu0 %v400
  %1604 = vmatprep.subr.bf16.mxu0 0
  %1605 = vmatpush1.bf16.msra.mxu0 0
  %1606 = vmatprep.subr.bf16.mxu0 0
  %1607 = vmatpush1.bf16.msra.mxu0 0
  %1608 = vmatprep.subr.bf16.mxu0 0
  %1609 = vmatpush1.bf16.msra.mxu0 0
  %1610 = vmatprep.subr.bf16.mxu0 0
  %1611 = vmatpush1.bf16.msra.mxu0 0
  %1612 = vmatprep.subr.bf16.mxu0 0
  %1613 = vmatpush1.bf16.msra.mxu0 0
  %1614 = vmatprep.subr.bf16.mxu0 0
  %1615 = vmatpush1.bf16.msra.mxu0 0
  %1616 = vmatprep.subr.bf16.mxu0 0
  %1617 = vmatpush1.bf16.msra.mxu0 0
  %1618 = vmatprep.subr.bf16.mxu0 0
  %1619 = vmatpush1.bf16.msra.mxu0 0
  %1620 = vmatprep.mubr.bf16.mxu0 0
  %1621 = vmatmul.mubr.bf16.gmra.mrb[0].mxu0 %v1587
  %v1622 = vpop.f32.mrb[0].mxu0
  %v1623 = vadd.f32 0.0, %v1622
  %v1624 = vpop.f32.mrb[0].mxu0
  %v1625 = vpop.f32.mrb[0].mxu0
  %v1626 = vadd.f32 0.0, %v1625
  %v1627 = vpop.f32.mrb[0].mxu0
  %1628 = vdwg.mxu0
  %v1629 = vadd.f32 %v1507, %v1623
  %v1630 = vadd.f32 %v1510, %v1626
  %v1631 = vtanh.pop %v1629
  %v1632 = vtanh.pop %v1630
  %v1633 = vsub.f32 %v1416, %v1631
  %v1634 = vsub.f32 %v1417, %v1632
  %v1635 = vmul.f32 %v1568, %v1633
  %v1636 = vmul.f32 %v1570, %v1634
  %v1637 = vadd.f32 %v1631, %v1635
  %v1638 = vadd.f32 %v1632, %v1636
  %1639 = vst [vmem:[#allocation2] sm:$0xff] %v1637
  %1640 = vst [vmem:[#allocation2 + $0x8] sm:$0xff] %v1638
  %v1641 = vpack.c.bf16 %v1638, %v1637
  %v1643 = vunpack.c.l.b16 %v1641
  %v1644 = vunpack.c.h.b16 %v1641
  %v1645 = vpack.c.b16 %v1643, %v1643
  %v1646 = vpack.c.b16 %v1644, %v1644
  %s1649 = scalar_lea.vmem %s6, 40
  %1650 = vst [vmem:[%s1649] sm:$0xf] %v1645
  %1651 = vst [vmem:[%s1649 + $0x4] sm:$0xf] %v1646
  %v1652 = vld [vmem:[#allocation2] sm:$0xff]
  %v1653 = vld [vmem:[#allocation2 + $0x8] sm:$0xff]
  %s1654 = scalar_lea.vmem %s0, 48
  %v1655 = vld [vmem:[%s1654] sm:$0xf]
  %v1656 = vld [vmem:[%s1654 + $0x4] sm:$0xf]
  %v1659 = vunpack.c.l.b16 %v1655
  %v1660 = vunpack.c.l.b16 %v1656
  %v1661 = vpack.c.b16 %v1660, %v1659
  %v1663 = vsel %vm108, %v1661, 0
  %1665 = vmatprep.subr.bf16.mxu0 %v117
  %1666 = vmatpush1.bf16.msra.mxu0 %v114
  %1667 = vmatprep.subr.bf16.mxu0 0
  %1668 = vmatpush1.bf16.msra.mxu0 0
  %1669 = vmatprep.subr.bf16.mxu0 0
  %1670 = vmatpush1.bf16.msra.mxu0 0
  %1671 = vmatprep.subr.bf16.mxu0 0
  %1672 = vmatpush1.bf16.msra.mxu0 0
  %1673 = vmatprep.subr.bf16.mxu0 0
  %1674 = vmatpush1.bf16.msra.mxu0 0
  %1675 = vmatprep.subr.bf16.mxu0 0
  %1676 = vmatpush1.bf16.msra.mxu0 0
  %1677 = vmatprep.subr.bf16.mxu0 0
  %1678 = vmatpush1.bf16.msra.mxu0 0
  %1679 = vmatprep.subr.bf16.mxu0 0
  %1680 = vmatpush1.bf16.msra.mxu0 0
  %1681 = vmatprep.subr.bf16.mxu0 0
  %1682 = vmatpush1.bf16.msra.mxu0 0
  %1683 = vmatprep.subr.bf16.mxu0 0
  %1684 = vmatpush1.bf16.msra.mxu0 0
  %1685 = vmatprep.subr.bf16.mxu0 0
  %1686 = vmatpush1.bf16.msra.mxu0 0
  %1687 = vmatprep.subr.bf16.mxu0 0
  %1688 = vmatpush1.bf16.msra.mxu0 0
  %1689 = vmatprep.subr.bf16.mxu0 0
  %1690 = vmatpush1.bf16.msra.mxu0 0
  %1691 = vmatprep.subr.bf16.mxu0 0
  %1692 = vmatpush1.bf16.msra.mxu0 0
  %1693 = vmatprep.subr.bf16.mxu0 0
  %1694 = vmatpush1.bf16.msra.mxu0 0
  %1695 = vmatprep.subr.bf16.mxu0 0
  %1696 = vmatpush1.bf16.msra.mxu0 0
  %1697 = vmatprep.mubr.bf16.mxu0 0
  %1698 = vmatmul.mubr.bf16.gmra.mrb[0].mxu0 %v1663
  %v1699 = vpop.f32.mrb[0].mxu0
  %v1700 = vadd.f32 %v74, %v1699
  %v1701 = vpop.f32.mrb[0].mxu0
  %v1702 = vadd.f32 %v78, %v1701
  %v1703 = vpop.f32.mrb[0].mxu0
  %v1704 = vadd.f32 %v74, %v1703
  %v1705 = vpop.f32.mrb[0].mxu0
  %v1706 = vadd.f32 %v78, %v1705
  %1707 = vdwg.mxu0
  %1708 = vmatprep.subr.bf16.mxu0 0
  %1709 = vmatpush1.bf16.msra.mxu0 %v120
  %1710 = vmatprep.subr.bf16.mxu0 0
  %1711 = vmatpush1.bf16.msra.mxu0 0
  %1712 = vmatprep.subr.bf16.mxu0 0
  %1713 = vmatpush1.bf16.msra.mxu0 0
  %1714 = vmatprep.subr.bf16.mxu0 0
  %1715 = vmatpush1.bf16.msra.mxu0 0
  %1716 = vmatprep.subr.bf16.mxu0 0
  %1717 = vmatpush1.bf16.msra.mxu0 0
  %1718 = vmatprep.subr.bf16.mxu0 0
  %1719 = vmatpush1.bf16.msra.mxu0 0
  %1720 = vmatprep.subr.bf16.mxu0 0
  %1721 = vmatpush1.bf16.msra.mxu0 0
  %1722 = vmatprep.subr.bf16.mxu0 0
  %1723 = vmatpush1.bf16.msra.mxu0 0
  %1724 = vmatprep.subr.bf16.mxu0 0
  %1725 = vmatpush1.bf16.msra.mxu0 0
  %1726 = vmatprep.subr.bf16.mxu0 0
  %1727 = vmatpush1.bf16.msra.mxu0 0
  %1728 = vmatprep.subr.bf16.mxu0 0
  %1729 = vmatpush1.bf16.msra.mxu0 0
  %1730 = vmatprep.subr.bf16.mxu0 0
  %1731 = vmatpush1.bf16.msra.mxu0 0
  %1732 = vmatprep.subr.bf16.mxu0 0
  %1733 = vmatpush1.bf16.msra.mxu0 0
  %1734 = vmatprep.subr.bf16.mxu0 0
  %1735 = vmatpush1.bf16.msra.mxu0 0
  %1736 = vmatprep.subr.bf16.mxu0 0
  %1737 = vmatpush1.bf16.msra.mxu0 0
  %1738 = vmatprep.subr.bf16.mxu0 0
  %1739 = vmatpush1.bf16.msra.mxu0 0
  %1740 = vmatprep.mubr.bf16.mxu0 0
  %1741 = vmatmul.mubr.bf16.gmra.mrb[0].mxu0 %v1663
  %v1742 = vpop.f32.mrb[0].mxu0
  %v1743 = vadd.f32 %v82, %v1742
  %v1744 = vpop.f32.mrb[0].mxu0
  %v1745 = vpop.f32.mrb[0].mxu0
  %v1746 = vadd.f32 %v82, %v1745
  %v1747 = vpop.f32.mrb[0].mxu0
  %1748 = vdwg.mxu0
  %v1749 = vpack.c.bf16 %v1653, %v1652
  %1750 = vmatprep.subr.bf16.mxu0 %v256
  %1751 = vmatpush1.bf16.msra.mxu0 %v255
  %1752 = vmatprep.subr.bf16.mxu0 %v258
  %1753 = vmatpush1.bf16.msra.mxu0 %v257
  %1754 = vmatprep.subr.bf16.mxu0 %v260
  %1755 = vmatpush1.bf16.msra.mxu0 %v259
  %1756 = vmatprep.subr.bf16.mxu0 %v262
  %1757 = vmatpush1.bf16.msra.mxu0 %v261
  %1758 = vmatprep.subr.bf16.mxu0 %v264
  %1759 = vmatpush1.bf16.msra.mxu0 %v263
  %1760 = vmatprep.subr.bf16.mxu0 %v266
  %1761 = vmatpush1.bf16.msra.mxu0 %v265
  %1762 = vmatprep.subr.bf16.mxu0 %v268
  %1763 = vmatpush1.bf16.msra.mxu0 %v267
  %1764 = vmatprep.subr.bf16.mxu0 %v270
  %1765 = vmatpush1.bf16.msra.mxu0 %v269
  %1766 = vmatprep.subr.bf16.mxu0 0
  %1767 = vmatpush1.bf16.msra.mxu0 0
  %1768 = vmatprep.subr.bf16.mxu0 0
  %1769 = vmatpush1.bf16.msra.mxu0 0
  %1770 = vmatprep.subr.bf16.mxu0 0
  %1771 = vmatpush1.bf16.msra.mxu0 0
  %1772 = vmatprep.subr.bf16.mxu0 0
  %1773 = vmatpush1.bf16.msra.mxu0 0
  %1774 = vmatprep.subr.bf16.mxu0 0
  %1775 = vmatpush1.bf16.msra.mxu0 0
  %1776 = vmatprep.subr.bf16.mxu0 0
  %1777 = vmatpush1.bf16.msra.mxu0 0
  %1778 = vmatprep.subr.bf16.mxu0 0
  %1779 = vmatpush1.bf16.msra.mxu0 0
  %1780 = vmatprep.subr.bf16.mxu0 0
  %1781 = vmatpush1.bf16.msra.mxu0 0
  %1782 = vmatprep.mubr.bf16.mxu0 0
  %1783 = vmatmul.mubr.bf16.gmra.mrb[0].mxu0 %v1749
  %v1784 = vpop.f32.mrb[0].mxu0
  %v1785 = vadd.f32 0.0, %v1784
  %v1786 = vpop.f32.mrb[0].mxu0
  %v1787 = vadd.f32 0.0, %v1786
  %v1788 = vpop.f32.mrb[0].mxu0
  %v1789 = vadd.f32 0.0, %v1788
  %v1790 = vpop.f32.mrb[0].mxu0
  %v1791 = vadd.f32 0.0, %v1790
  %1792 = vdwg.mxu0
  %v1793 = vadd.f32 %v1700, %v1785
  %v1794 = vadd.f32 %v1704, %v1789
  %v1795 = vxor.u32 %v1793, 2147483648
  %v1796 = vxor.u32 %v1794, 2147483648
  %v1797 = vmul.f32 %v1795, 1.442695
  %v1798 = vpow.pop %v1797
  %v1799 = vmul.f32 %v1796, 1.442695
  %v1800 = vpow.pop %v1799
  %v1801 = vadd.f32 %v1798, 1.0
  %v1802 = vadd.f32 %v1800, 1.0
  %v1803 = vrcp.pop %v1801
  %v1804 = vmul.f32 1.0, %v1803
  %v1805 = vrcp.pop %v1802
  %v1806 = vmul.f32 1.0, %v1805
  %v1807 = vadd.f32 %v1702, %v1787
  %v1808 = vadd.f32 %v1706, %v1791
  %v1809 = vxor.u32 %v1807, 2147483648
  %v1810 = vxor.u32 %v1808, 2147483648
  %v1811 = vmul.f32 %v1809, 1.442695
  %v1812 = vpow.pop %v1811
  %v1813 = vmul.f32 %v1810, 1.442695
  %v1814 = vpow.pop %v1813
  %v1815 = vadd.f32 %v1812, 1.0
  %v1816 = vadd.f32 %v1814, 1.0
  %v1817 = vrcp.pop %v1815
  %v1818 = vmul.f32 1.0, %v1817
  %v1819 = vrcp.pop %v1816
  %v1820 = vmul.f32 1.0, %v1819
  %v1821 = vmul.f32 %v1652, %v1818
  %v1822 = vmul.f32 %v1653, %v1820
  %v1823 = vpack.c.bf16 %v1822, %v1821
  %1824 = vmatprep.subr.bf16.mxu0 0
  %1825 = vmatpush1.bf16.msra.mxu0 %v393
  %1826 = vmatprep.subr.bf16.mxu0 0
  %1827 = vmatpush1.bf16.msra.mxu0 %v394
  %1828 = vmatprep.subr.bf16.mxu0 0
  %1829 = vmatpush1.bf16.msra.mxu0 %v395
  %1830 = vmatprep.subr.bf16.mxu0 0
  %1831 = vmatpush1.bf16.msra.mxu0 %v396
  %1832 = vmatprep.subr.bf16.mxu0 0
  %1833 = vmatpush1.bf16.msra.mxu0 %v397
  %1834 = vmatprep.subr.bf16.mxu0 0
  %1835 = vmatpush1.bf16.msra.mxu0 %v398
  %1836 = vmatprep.subr.bf16.mxu0 0
  %1837 = vmatpush1.bf16.msra.mxu0 %v399
  %1838 = vmatprep.subr.bf16.mxu0 0
  %1839 = vmatpush1.bf16.msra.mxu0 %v400
  %1840 = vmatprep.subr.bf16.mxu0 0
  %1841 = vmatpush1.bf16.msra.mxu0 0
  %1842 = vmatprep.subr.bf16.mxu0 0
  %1843 = vmatpush1.bf16.msra.mxu0 0
  %1844 = vmatprep.subr.bf16.mxu0 0
  %1845 = vmatpush1.bf16.msra.mxu0 0
  %1846 = vmatprep.subr.bf16.mxu0 0
  %1847 = vmatpush1.bf16.msra.mxu0 0
  %1848 = vmatprep.subr.bf16.mxu0 0
  %1849 = vmatpush1.bf16.msra.mxu0 0
  %1850 = vmatprep.subr.bf16.mxu0 0
  %1851 = vmatpush1.bf16.msra.mxu0 0
  %1852 = vmatprep.subr.bf16.mxu0 0
  %1853 = vmatpush1.bf16.msra.mxu0 0
  %1854 = vmatprep.subr.bf16.mxu0 0
  %1855 = vmatpush1.bf16.msra.mxu0 0
  %1856 = vmatprep.mubr.bf16.mxu0 0
  %1857 = vmatmul.mubr.bf16.gmra.mrb[0].mxu0 %v1823
  %v1858 = vpop.f32.mrb[0].mxu0
  %v1859 = vadd.f32 0.0, %v1858
  %v1860 = vpop.f32.mrb[0].mxu0
  %v1861 = vpop.f32.mrb[0].mxu0
  %v1862 = vadd.f32 0.0, %v1861
  %v1863 = vpop.f32.mrb[0].mxu0
  %1864 = vdwg.mxu0
  %v1865 = vadd.f32 %v1743, %v1859
  %v1866 = vadd.f32 %v1746, %v1862
  %v1867 = vtanh.pop %v1865
  %v1868 = vtanh.pop %v1866
  %v1869 = vsub.f32 %v1652, %v1867
  %v1870 = vsub.f32 %v1653, %v1868
  %v1871 = vmul.f32 %v1804, %v1869
  %v1872 = vmul.f32 %v1806, %v1870
  %v1873 = vadd.f32 %v1867, %v1871
  %v1874 = vadd.f32 %v1868, %v1872
  %1875 = vst [vmem:[#allocation2] sm:$0xff] %v1873
  %1876 = vst [vmem:[#allocation2 + $0x8] sm:$0xff] %v1874
  %v1877 = vpack.c.bf16 %v1874, %v1873
  %v1879 = vunpack.c.l.b16 %v1877
  %v1880 = vunpack.c.h.b16 %v1877
  %v1881 = vpack.c.b16 %v1879, %v1879
  %v1882 = vpack.c.b16 %v1880, %v1880
  %s1885 = scalar_lea.vmem %s6, 48
  %1886 = vst [vmem:[%s1885] sm:$0xf] %v1881
  %1887 = vst [vmem:[%s1885 + $0x4] sm:$0xf] %v1882
  %v1888 = vld [vmem:[#allocation2] sm:$0xff]
  %v1889 = vld [vmem:[#allocation2 + $0x8] sm:$0xff]
  %s1890 = scalar_lea.vmem %s0, 56
  %v1891 = vld [vmem:[%s1890] sm:$0xf]
  %v1892 = vld [vmem:[%s1890 + $0x4] sm:$0xf]
  %v1895 = vunpack.c.l.b16 %v1891
  %v1896 = vunpack.c.l.b16 %v1892
  %v1897 = vpack.c.b16 %v1896, %v1895
  %v1899 = vsel %vm108, %v1897, 0
  %1901 = vmatprep.subr.bf16.mxu0 %v117
  %1902 = vmatpush1.bf16.msra.mxu0 %v114
  %1903 = vmatprep.subr.bf16.mxu0 0
  %1904 = vmatpush1.bf16.msra.mxu0 0
  %1905 = vmatprep.subr.bf16.mxu0 0
  %1906 = vmatpush1.bf16.msra.mxu0 0
  %1907 = vmatprep.subr.bf16.mxu0 0
  %1908 = vmatpush1.bf16.msra.mxu0 0
  %1909 = vmatprep.subr.bf16.mxu0 0
  %1910 = vmatpush1.bf16.msra.mxu0 0
  %1911 = vmatprep.subr.bf16.mxu0 0
  %1912 = vmatpush1.bf16.msra.mxu0 0
  %1913 = vmatprep.subr.bf16.mxu0 0
  %1914 = vmatpush1.bf16.msra.mxu0 0
  %1915 = vmatprep.subr.bf16.mxu0 0
  %1916 = vmatpush1.bf16.msra.mxu0 0
  %1917 = vmatprep.subr.bf16.mxu0 0
  %1918 = vmatpush1.bf16.msra.mxu0 0
  %1919 = vmatprep.subr.bf16.mxu0 0
  %1920 = vmatpush1.bf16.msra.mxu0 0
  %1921 = vmatprep.subr.bf16.mxu0 0
  %1922 = vmatpush1.bf16.msra.mxu0 0
  %1923 = vmatprep.subr.bf16.mxu0 0
  %1924 = vmatpush1.bf16.msra.mxu0 0
  %1925 = vmatprep.subr.bf16.mxu0 0
  %1926 = vmatpush1.bf16.msra.mxu0 0
  %1927 = vmatprep.subr.bf16.mxu0 0
  %1928 = vmatpush1.bf16.msra.mxu0 0
  %1929 = vmatprep.subr.bf16.mxu0 0
  %1930 = vmatpush1.bf16.msra.mxu0 0
  %1931 = vmatprep.subr.bf16.mxu0 0
  %1932 = vmatpush1.bf16.msra.mxu0 0
  %1933 = vmatprep.mubr.bf16.mxu0 0
  %1934 = vmatmul.mubr.bf16.gmra.mrb[0].mxu0 %v1899
  %v1935 = vpop.f32.mrb[0].mxu0
  %v1936 = vadd.f32 %v74, %v1935
  %v1937 = vpop.f32.mrb[0].mxu0
  %v1938 = vadd.f32 %v78, %v1937
  %v1939 = vpop.f32.mrb[0].mxu0
  %v1940 = vadd.f32 %v74, %v1939
  %v1941 = vpop.f32.mrb[0].mxu0
  %v1942 = vadd.f32 %v78, %v1941
  %1943 = vdwg.mxu0
  %1944 = vmatprep.subr.bf16.mxu0 0
  %1945 = vmatpush1.bf16.msra.mxu0 %v120
  %1946 = vmatprep.subr.bf16.mxu0 0
  %1947 = vmatpush1.bf16.msra.mxu0 0
  %1948 = vmatprep.subr.bf16.mxu0 0
  %1949 = vmatpush1.bf16.msra.mxu0 0
  %1950 = vmatprep.subr.bf16.mxu0 0
  %1951 = vmatpush1.bf16.msra.mxu0 0
  %1952 = vmatprep.subr.bf16.mxu0 0
  %1953 = vmatpush1.bf16.msra.mxu0 0
  %1954 = vmatprep.subr.bf16.mxu0 0
  %1955 = vmatpush1.bf16.msra.mxu0 0
  %1956 = vmatprep.subr.bf16.mxu0 0
  %1957 = vmatpush1.bf16.msra.mxu0 0
  %1958 = vmatprep.subr.bf16.mxu0 0
  %1959 = vmatpush1.bf16.msra.mxu0 0
  %1960 = vmatprep.subr.bf16.mxu0 0
  %1961 = vmatpush1.bf16.msra.mxu0 0
  %1962 = vmatprep.subr.bf16.mxu0 0
  %1963 = vmatpush1.bf16.msra.mxu0 0
  %1964 = vmatprep.subr.bf16.mxu0 0
  %1965 = vmatpush1.bf16.msra.mxu0 0
  %1966 = vmatprep.subr.bf16.mxu0 0
  %1967 = vmatpush1.bf16.msra.mxu0 0
  %1968 = vmatprep.subr.bf16.mxu0 0
  %1969 = vmatpush1.bf16.msra.mxu0 0
  %1970 = vmatprep.subr.bf16.mxu0 0
  %1971 = vmatpush1.bf16.msra.mxu0 0
  %1972 = vmatprep.subr.bf16.mxu0 0
  %1973 = vmatpush1.bf16.msra.mxu0 0
  %1974 = vmatprep.subr.bf16.mxu0 0
  %1975 = vmatpush1.bf16.msra.mxu0 0
  %1976 = vmatprep.mubr.bf16.mxu0 0
  %1977 = vmatmul.mubr.bf16.gmra.mrb[0].mxu0 %v1899
  %v1978 = vpop.f32.mrb[0].mxu0
  %v1979 = vadd.f32 %v82, %v1978
  %v1980 = vpop.f32.mrb[0].mxu0
  %v1981 = vpop.f32.mrb[0].mxu0
  %v1982 = vadd.f32 %v82, %v1981
  %v1983 = vpop.f32.mrb[0].mxu0
  %1984 = vdwg.mxu0
  %v1985 = vpack.c.bf16 %v1889, %v1888
  %1986 = vmatprep.subr.bf16.mxu0 %v256
  %1987 = vmatpush1.bf16.msra.mxu0 %v255
  %1988 = vmatprep.subr.bf16.mxu0 %v258
  %1989 = vmatpush1.bf16.msra.mxu0 %v257
  %1990 = vmatprep.subr.bf16.mxu0 %v260
  %1991 = vmatpush1.bf16.msra.mxu0 %v259
  %1992 = vmatprep.subr.bf16.mxu0 %v262
  %1993 = vmatpush1.bf16.msra.mxu0 %v261
  %1994 = vmatprep.subr.bf16.mxu0 %v264
  %1995 = vmatpush1.bf16.msra.mxu0 %v263
  %1996 = vmatprep.subr.bf16.mxu0 %v266
  %1997 = vmatpush1.bf16.msra.mxu0 %v265
  %1998 = vmatprep.subr.bf16.mxu0 %v268
  %1999 = vmatpush1.bf16.msra.mxu0 %v267
  %2000 = vmatprep.subr.bf16.mxu0 %v270
  %2001 = vmatpush1.bf16.msra.mxu0 %v269
  %2002 = vmatprep.subr.bf16.mxu0 0
  %2003 = vmatpush1.bf16.msra.mxu0 0
  %2004 = vmatprep.subr.bf16.mxu0 0
  %2005 = vmatpush1.bf16.msra.mxu0 0
  %2006 = vmatprep.subr.bf16.mxu0 0
  %2007 = vmatpush1.bf16.msra.mxu0 0
  %2008 = vmatprep.subr.bf16.mxu0 0
  %2009 = vmatpush1.bf16.msra.mxu0 0
  %2010 = vmatprep.subr.bf16.mxu0 0
  %2011 = vmatpush1.bf16.msra.mxu0 0
  %2012 = vmatprep.subr.bf16.mxu0 0
  %2013 = vmatpush1.bf16.msra.mxu0 0
  %2014 = vmatprep.subr.bf16.mxu0 0
  %2015 = vmatpush1.bf16.msra.mxu0 0
  %2016 = vmatprep.subr.bf16.mxu0 0
  %2017 = vmatpush1.bf16.msra.mxu0 0
  %2018 = vmatprep.mubr.bf16.mxu0 0
  %2019 = vmatmul.mubr.bf16.gmra.mrb[0].mxu0 %v1985
  %v2020 = vpop.f32.mrb[0].mxu0
  %v2021 = vadd.f32 0.0, %v2020
  %v2022 = vpop.f32.mrb[0].mxu0
  %v2023 = vadd.f32 0.0, %v2022
  %v2024 = vpop.f32.mrb[0].mxu0
  %v2025 = vadd.f32 0.0, %v2024
  %v2026 = vpop.f32.mrb[0].mxu0
  %v2027 = vadd.f32 0.0, %v2026
  %2028 = vdwg.mxu0
  %v2029 = vadd.f32 %v1936, %v2021
  %v2030 = vadd.f32 %v1940, %v2025
  %v2031 = vxor.u32 %v2029, 2147483648
  %v2032 = vxor.u32 %v2030, 2147483648
  %v2033 = vmul.f32 %v2031, 1.442695
  %v2034 = vpow.pop %v2033
  %v2035 = vmul.f32 %v2032, 1.442695
  %v2036 = vpow.pop %v2035
  %v2037 = vadd.f32 %v2034, 1.0
  %v2038 = vadd.f32 %v2036, 1.0
  %v2039 = vrcp.pop %v2037
  %v2040 = vmul.f32 1.0, %v2039
  %v2041 = vrcp.pop %v2038
  %v2042 = vmul.f32 1.0, %v2041
  %v2043 = vadd.f32 %v1938, %v2023
  %v2044 = vadd.f32 %v1942, %v2027
  %v2045 = vxor.u32 %v2043, 2147483648
  %v2046 = vxor.u32 %v2044, 2147483648
  %v2047 = vmul.f32 %v2045, 1.442695
  %v2048 = vpow.pop %v2047
  %v2049 = vmul.f32 %v2046, 1.442695
  %v2050 = vpow.pop %v2049
  %v2051 = vadd.f32 %v2048, 1.0
  %v2052 = vadd.f32 %v2050, 1.0
  %v2053 = vrcp.pop %v2051
  %v2054 = vmul.f32 1.0, %v2053
  %v2055 = vrcp.pop %v2052
  %v2056 = vmul.f32 1.0, %v2055
  %v2057 = vmul.f32 %v1888, %v2054
  %v2058 = vmul.f32 %v1889, %v2056
  %v2059 = vpack.c.bf16 %v2058, %v2057
  %2060 = vmatprep.subr.bf16.mxu0 0
  %2061 = vmatpush1.bf16.msra.mxu0 %v393
  %2062 = vmatprep.subr.bf16.mxu0 0
  %2063 = vmatpush1.bf16.msra.mxu0 %v394
  %2064 = vmatprep.subr.bf16.mxu0 0
  %2065 = vmatpush1.bf16.msra.mxu0 %v395
  %2066 = vmatprep.subr.bf16.mxu0 0
  %2067 = vmatpush1.bf16.msra.mxu0 %v396
  %2068 = vmatprep.subr.bf16.mxu0 0
  %2069 = vmatpush1.bf16.msra.mxu0 %v397
  %2070 = vmatprep.subr.bf16.mxu0 0
  %2071 = vmatpush1.bf16.msra.mxu0 %v398
  %2072 = vmatprep.subr.bf16.mxu0 0
  %2073 = vmatpush1.bf16.msra.mxu0 %v399
  %2074 = vmatprep.subr.bf16.mxu0 0
  %2075 = vmatpush1.bf16.msra.mxu0 %v400
  %2076 = vmatprep.subr.bf16.mxu0 0
  %2077 = vmatpush1.bf16.msra.mxu0 0
  %2078 = vmatprep.subr.bf16.mxu0 0
  %2079 = vmatpush1.bf16.msra.mxu0 0
  %2080 = vmatprep.subr.bf16.mxu0 0
  %2081 = vmatpush1.bf16.msra.mxu0 0
  %2082 = vmatprep.subr.bf16.mxu0 0
  %2083 = vmatpush1.bf16.msra.mxu0 0
  %2084 = vmatprep.subr.bf16.mxu0 0
  %2085 = vmatpush1.bf16.msra.mxu0 0
  %2086 = vmatprep.subr.bf16.mxu0 0
  %2087 = vmatpush1.bf16.msra.mxu0 0
  %2088 = vmatprep.subr.bf16.mxu0 0
  %2089 = vmatpush1.bf16.msra.mxu0 0
  %2090 = vmatprep.subr.bf16.mxu0 0
  %2091 = vmatpush1.bf16.msra.mxu0 0
  %2092 = vmatprep.mubr.bf16.mxu0 0
  %2093 = vmatmul.mubr.bf16.gmra.mrb[0].mxu0 %v2059
  %v2094 = vpop.f32.mrb[0].mxu0
  %v2095 = vadd.f32 0.0, %v2094
  %v2096 = vpop.f32.mrb[0].mxu0
  %v2097 = vpop.f32.mrb[0].mxu0
  %v2098 = vadd.f32 0.0, %v2097
  %v2099 = vpop.f32.mrb[0].mxu0
  %2100 = vdwg.mxu0
  %v2101 = vadd.f32 %v1979, %v2095
  %v2102 = vadd.f32 %v1982, %v2098
  %v2103 = vtanh.pop %v2101
  %v2104 = vtanh.pop %v2102
  %v2105 = vsub.f32 %v1888, %v2103
  %v2106 = vsub.f32 %v1889, %v2104
  %v2107 = vmul.f32 %v2040, %v2105
  %v2108 = vmul.f32 %v2042, %v2106
  %v2109 = vadd.f32 %v2103, %v2107
  %v2110 = vadd.f32 %v2104, %v2108
  %2111 = vst [vmem:[#allocation2] sm:$0xff] %v2109
  %2112 = vst [vmem:[#allocation2 + $0x8] sm:$0xff] %v2110
  %v2113 = vpack.c.bf16 %v2110, %v2109
  %v2115 = vunpack.c.l.b16 %v2113
  %v2116 = vunpack.c.h.b16 %v2113
  %v2117 = vpack.c.b16 %v2115, %v2115
  %v2118 = vpack.c.b16 %v2116, %v2116
  %s2121 = scalar_lea.vmem %s6, 56
  %2122 = vst [vmem:[%s2121] sm:$0xf] %v2117
  %2123 = vst [vmem:[%s2121 + $0x4] sm:$0xf] %v2118
  // Predicated region
  $region30: #{tgcn_sequence.3} parent=0 // pred_check
    _
  $region31: #{tgcn_sequence.3} parent=0 // pred_check_branch
    %2125 = sbr.rel (0) target = $region33
  $region32: #{tgcn_sequence.3} parent=0 // pred_region
    _
  $region33: #{tgcn_sequence.3} parent=0 // pred_fallthru
    _
  // Predicated region
  $region34: #{tgcn_sequence.3} parent=0 // pred_check
    _
  $region35: #{tgcn_sequence.3} parent=0 // pred_check_branch
    %2127 = sbr.rel (0) target = $region37
  $region36: #{tgcn_sequence.3} parent=0 // pred_region
    _
  $region37: #{tgcn_sequence.3} parent=0 // pred_fallthru
    _

</llo_original>
